<compile_context>
chip_gen: v6e
topology: v6e:2x2x1
jax: 0.10.0
libtpu: 0.0.40
codegen_flags: <defaults>
</compile_context>

<pallas_src>
import functools

import jax
import jax.numpy as jnp
from jax.experimental import pallas as pl
from jax.experimental.pallas import tpu as pltpu

D_IN = 2048       # backbone hidden size (decoder0 input)
D_HID = 128       # decoder0 / decoder width
D_OUT = 5         # d_output
D_OUT_PAD = 128   # lane-dense padded output width


def ft_kernel(h_ref, w0_ref, b0_ref, w1_ref, b1_ref, w2_ref, b2_ref,
              o_ref, acc_ref, *, t_total):
    t = pl.program_id(1)

    @pl.when(t == 0)
    def _():
        acc_ref[...] = jnp.zeros_like(acc_ref)

    # Streaming sum over the T axis of this block (f32 accumulation; upcast is
    # a no-op for f32 inputs and keeps bf16 h streams at full precision).
    # TODO(synk): if a v7x bundle shows the cross-sublane reduce binding
    # VALU/XLU with bf16 h at 3.2 TB/s, keep per-sublane partials here and
    # defer the sublane reduce to the epilogue.
    acc_ref[...] += jnp.sum(h_ref[...].astype(jnp.float32), axis=1)

    @pl.when(t == pl.num_programs(1) - 1)
    def _():
        x = acc_ref[...] * (1.0 / t_total)                                  # mean
        x = jnp.dot(x, w0_ref[...], preferred_element_type=jnp.float32) + b0_ref[...]
        x = jnp.maximum(x, 0.0)                                             # relu(drop0(.))
        x = jnp.dot(x, w1_ref[...], preferred_element_type=jnp.float32) + b1_ref[...]
        x = jnp.maximum(x, 0.0)                                             # relu(drop1(.))
        y = jnp.dot(x, w2_ref[...], preferred_element_type=jnp.float32) + b2_ref[...]
        o_ref[...] = y.astype(o_ref.dtype)


def _chip_config():
    """Per-generation tiling/VMEM budget (h_buf_budget = bytes per h buffer)."""
    kind = ""
    try:
        kind = jax.devices()[0].device_kind.lower()
    except Exception:
        pass
    if "v7" in kind:
        # 64 MiB physical VMEM, 3.2 TB/s HBM, 2 TensorCores: ~8 MiB h blocks,
        # 3-deep h buffering so prefetch covers the epilogue step.
        return dict(num_tc=2, h_buf_budget=8 << 20, h_bufs=3, vmem_cap=48 << 20)
    if "v6" in kind:
        # 128 MiB VMEM, 1.4 TB/s HBM: large blocks amortize per-step overhead.
        return dict(num_tc=1, h_buf_budget=12 << 20, h_bufs=2, vmem_cap=96 << 20)
    if "v5" in kind:
        # ~820 GB/s HBM: 2-4 MiB blocks already >=85% roofline; keep headroom.
        return dict(num_tc=1, h_buf_budget=4 << 20, h_bufs=2, vmem_cap=64 << 20)
    return dict(num_tc=1, h_buf_budget=4 << 20, h_bufs=2, vmem_cap=48 << 20)


def _pick_block(total, target, align):
    """Largest multiple of `align` that divides `total` and is <= target,
    else the full extent (always a legal block)."""
    if total <= target:
        return total
    c = (target // align) * align
    while c >= align:
        if total % c == 0:
            return c
        c -= align
    return total


def _select_tiles(B, T, itemsize, cfg):
    # (8,128)/(16,128) min tile on the h block's trailing dims is dtype-aware.
    t_align = {4: 8, 2: 16, 1: 32}.get(itemsize, 8)
    budget = cfg["h_buf_budget"]

    b_cap = 256
    if cfg["num_tc"] >= 2 and B >= 16:
        # Keep >= 2 B-tiles so both v7x TensorCores (parallel B axis) have work.
        b_cap = min(b_cap, max(8, ((B // 2) // 8) * 8))
    # Joint budget: even the minimal t_block must fit one h buffer.
    b_cap = min(b_cap, max(8, budget // (t_align * D_IN * itemsize)))
    b_block = _pick_block(B, b_cap, 8)

    t_target = max(t_align, budget // max(1, b_block * D_IN * itemsize))
    t_block = _pick_block(T, t_target, t_align)
    return b_block, t_block


def ft_forward(h, w0, b0, w1, b1, w2, b2, *, b_block=None, t_block=None):
    """h: (B, T, 2048) float32/bfloat16 -> (B, D_OUT) float32."""
    B, T, D = h.shape
    assert D == D_IN

    cfg = _chip_config()
    itemsize = jnp.dtype(h.dtype).itemsize

    auto_b, auto_t = _select_tiles(B, T, itemsize, cfg)
    if b_block is None:
        b_block = auto_b
    if t_block is None:
        t_block = auto_t
    assert B % b_block == 0 and T % t_block == 0
    nb, nt = B // b_block, T // t_block

    # ---- lane-dense output: pad decoder1 weights to 128 output columns -----
    w2p = jnp.zeros((D_HID, D_OUT_PAD), w2.dtype).at[:, :D_OUT].set(w2)
    b2p = jnp.zeros((1, D_OUT_PAD), b2.dtype).at[:, :D_OUT].set(b2)

    # Constant index_map -> fetched once; single-buffered (saves ~1.1 MiB VMEM).
    def const(shape):
        return pl.BlockSpec(shape, lambda i, t: tuple(0 for _ in shape),
                            pipeline_mode=pl.Buffered(1))

    h_bufs = cfg["h_bufs"]
    h_pipeline_mode = pl.Buffered(h_bufs) if h_bufs != 2 else None

    # ---- VMEM limit from actual resident buffers (+50% headroom), per-chip cap
    h_block_bytes = b_block * t_block * D_IN * itemsize
    weight_bytes = 4 * (D_IN * D_HID + D_HID + D_HID * D_HID + D_HID
                        + D_HID * D_OUT_PAD + D_OUT_PAD)
    acc_bytes = b_block * D_IN * 4
    out_bytes = 2 * b_block * D_OUT_PAD * 4
    total_bytes = h_bufs * h_block_bytes + weight_bytes + acc_bytes + out_bytes
    vmem_limit = min(cfg["vmem_cap"], total_bytes * 3 // 2 + (4 << 20))
    vmem_limit = max(vmem_limit, 16 << 20)

    out_padded = pl.pallas_call(
        functools.partial(ft_kernel, t_total=float(T)),
        out_shape=jax.ShapeDtypeStruct((B, D_OUT_PAD), jnp.float32),
        grid_spec=pltpu.PrefetchScalarGridSpec(
            num_scalar_prefetch=0,
            grid=(nb, nt),
            in_specs=[
                pl.BlockSpec((b_block, t_block, D_IN), lambda i, t: (i, t, 0),
                             pipeline_mode=h_pipeline_mode),                  # h (streamed)
                const((D_IN, D_HID)),       # w0  (resident)
                const((1, D_HID)),          # b0
                const((D_HID, D_HID)),      # w1
                const((1, D_HID)),          # b1
                const((D_HID, D_OUT_PAD)),  # w2 (padded)
                const((1, D_OUT_PAD)),      # b2 (padded)
            ],
            out_specs=pl.BlockSpec((b_block, D_OUT_PAD), lambda i, t: (i, 0)),
            scratch_shapes=[pltpu.VMEM((b_block, D_IN), jnp.float32)],
        ),
        compiler_params=pltpu.CompilerParams(
            dimension_semantics=("parallel", "arbitrary"),
            vmem_limit_bytes=int(vmem_limit),
        ),
    )(h, w0, b0, w1, b1, w2p, b2p)

    return out_padded[:, :D_OUT]


def init_params(key):
    """Deterministic synthetic parameters (shapes from the nn.Linear defs)."""
    k0, k1, k2, k3, k4, k5 = jax.random.split(key, 6)
    # PyTorch nn.Linear weight is (out, in); we store transposed (in, out) so
    # the kernel does x @ W.
    w0 = jax.random.normal(k0, (D_IN, D_HID), jnp.float32) * (1.0 / jnp.sqrt(D_IN))
    b0 = jax.random.normal(k1, (1, D_HID), jnp.float32) * 0.01
    w1 = jax.random.normal(k2, (D_HID, D_HID), jnp.float32) * (1.0 / jnp.sqrt(D_HID))
    b1 = jax.random.normal(k3, (1, D_HID), jnp.float32) * 0.01
    w2 = jax.random.normal(k4, (D_HID, D_OUT), jnp.float32) * (1.0 / jnp.sqrt(D_HID))
    b2 = jax.random.normal(k5, (1, D_OUT), jnp.float32) * 0.01
    return w0, b0, w1, b1, w2, b2


def ft_reference(h, w0, b0, w1, b1, w2, b2):
    x = jnp.mean(h.astype(jnp.float32), axis=1)
    x = jnp.maximum(x @ w0 + b0, 0.0)
    x = jnp.maximum(x @ w1 + b1, 0.0)
    return x @ w2 + b2


if __name__ == "__main__":
    key = jax.random.PRNGKey(0)
    k_h, k_p = jax.random.split(key)

    params = init_params(k_p)

    # f32 path: t_block=8 -> grid (1, 2) exercises streaming reduction + epilogue.
    B, T = 2, 16
    h32 = jax.random.normal(k_h, (B, T, D_IN), jnp.float32)
    out32 = jax.block_until_ready(ft_forward(h32, *params, t_block=8))
    ref32 = ft_reference(h32, *params)
    assert out32.shape == (B, D_OUT)
    assert jnp.allclose(out32, ref32, atol=1e-4, rtol=1e-4), "f32 mismatch vs reference"

    # bf16 streaming path (dtype-aware 16-row T alignment), f32 accumulation.
    T2 = 32
    h16 = jax.random.normal(k_h, (B, T2, D_IN), jnp.float32).astype(jnp.bfloat16)
    out16 = jax.block_until_ready(ft_forward(h16, *params, t_block=16))
    ref16 = ft_reference(h16, *params)
    assert out16.shape == (B, D_OUT)
    assert jnp.allclose(out16, ref16, atol=1e-3, rtol=1e-3), "bf16 mismatch vs reference"

    print("KERNEL_OK")
</pallas_src>

<mosaic_0001>
module attributes {stable_mosaic.version = 11 : i64} {
  func.func @ft_kernel(%arg0: i32, %arg1: i32, %arg2: memref<2x8x2048xf32, #tpu.memory_space<vmem>>, %arg3: memref<2048x128xf32, #tpu.memory_space<vmem>>, %arg4: memref<1x128xf32, #tpu.memory_space<vmem>>, %arg5: memref<128x128xf32, #tpu.memory_space<vmem>>, %arg6: memref<1x128xf32, #tpu.memory_space<vmem>>, %arg7: memref<128x128xf32, #tpu.memory_space<vmem>>, %arg8: memref<1x128xf32, #tpu.memory_space<vmem>>, %arg9: memref<2x128xf32, #tpu.memory_space<vmem>>, %arg10: memref<2x2048xf32, #tpu.memory_space<vmem>>) attributes {dimension_semantics = [#tpu.dimension_semantics<parallel>, #tpu.dimension_semantics<arbitrary>], iteration_bounds = array<i64: 1, 2>, scalar_prefetch = 0 : i64, scratch_operands = 1 : i64, tpu.core_type = #tpu.core_type<tc>, window_params = [{transform_indices = @transform_0, window_bounds = array<i64: 2, 8, 2048>}, {pipeline_mode = #tpu.pipeline_mode<synchronous>, transform_indices = @transform_1, window_bounds = array<i64: 2048, 128>}, {pipeline_mode = #tpu.pipeline_mode<synchronous>, transform_indices = @transform_2, window_bounds = array<i64: 1, 128>}, {pipeline_mode = #tpu.pipeline_mode<synchronous>, transform_indices = @transform_3, window_bounds = array<i64: 128, 128>}, {pipeline_mode = #tpu.pipeline_mode<synchronous>, transform_indices = @transform_4, window_bounds = array<i64: 1, 128>}, {pipeline_mode = #tpu.pipeline_mode<synchronous>, transform_indices = @transform_5, window_bounds = array<i64: 128, 128>}, {pipeline_mode = #tpu.pipeline_mode<synchronous>, transform_indices = @transform_6, window_bounds = array<i64: 1, 128>}, {transform_indices = @transform_7, window_bounds = array<i64: 2, 128>}]} {
    %c0_i32 = arith.constant 0 : i32
    %0 = arith.cmpi eq, %arg1, %c0_i32 : i32
    %1 = arith.extui %0 : i1 to i32
    %c0_i32_0 = arith.constant 0 : i32
    %2 = arith.cmpi ne, %1, %c0_i32_0 : i32
    scf.if %2 {
      %cst_8 = arith.constant 0.000000e+00 : f32
      %11 = vector.broadcast %cst_8 : f32 to vector<2x2048xf32>
      %c0_9 = arith.constant 0 : index
      %c0_10 = arith.constant 0 : index
      %12 = vector.load %arg10[%c0_9, %c0_10] : memref<2x2048xf32, #tpu.memory_space<vmem>>, vector<2x2048xf32>
      tpu.vector_store %arg10[%c0_9, %c0_10], %11 {strides = array<i32>} : memref<2x2048xf32, #tpu.memory_space<vmem>>, vector<2x2048xf32>,
    } else {
    }
    %c0 = arith.constant 0 : index
    %c0_1 = arith.constant 0 : index
    %3 = vector.load %arg10[%c0, %c0_1] : memref<2x2048xf32, #tpu.memory_space<vmem>>, vector<2x2048xf32>
    %c0_2 = arith.constant 0 : index
    %c0_3 = arith.constant 0 : index
    %c0_4 = arith.constant 0 : index
    %4 = vector.load %arg2[%c0_2, %c0_3, %c0_4] : memref<2x8x2048xf32, #tpu.memory_space<vmem>>, vector<2x8x2048xf32>
    %cst = arith.constant dense<0.000000e+00> : vector<2x2048xf32>
    %5 = vector.multi_reduction <add>, %4, %cst [1] : vector<2x8x2048xf32> to vector<2x2048xf32>
    %6 = arith.addf %3, %5 : vector<2x2048xf32>
    %c0_5 = arith.constant 0 : index
    %c0_6 = arith.constant 0 : index
    %7 = vector.load %arg10[%c0_5, %c0_6] : memref<2x2048xf32, #tpu.memory_space<vmem>>, vector<2x2048xf32>
    tpu.vector_store %arg10[%c0_5, %c0_6], %6 {strides = array<i32>} : memref<2x2048xf32, #tpu.memory_space<vmem>>, vector<2x2048xf32>,
    %c1_i32 = arith.constant 1 : i32
    %8 = arith.cmpi eq, %arg1, %c1_i32 : i32
    %9 = arith.extui %8 : i1 to i32
    %c0_i32_7 = arith.constant 0 : i32
    %10 = arith.cmpi ne, %9, %c0_i32_7 : i32
    scf.if %10 {
      %c0_8 = arith.constant 0 : index
      %c0_9 = arith.constant 0 : index
      %11 = vector.load %arg10[%c0_8, %c0_9] : memref<2x2048xf32, #tpu.memory_space<vmem>>, vector<2x2048xf32>
      %cst_10 = arith.constant 6.250000e-02 : f32
      %12 = vector.broadcast %cst_10 : f32 to vector<2x2048xf32>
      %13 = arith.mulf %11, %12 : vector<2x2048xf32>
      %c0_11 = arith.constant 0 : index
      %c0_12 = arith.constant 0 : index
      %14 = vector.load %arg3[%c0_11, %c0_12] : memref<2048x128xf32, #tpu.memory_space<vmem>>, vector<2048x128xf32>
      %cst_13 = arith.constant dense<0.000000e+00> : vector<2x128xf32>
      %15 = tpu.matmul %13, %14, %cst_13 {dimension_numbers = #tpu.dot_dimension_numbers<[1], [0], [0], [1], [0, 0, 1, 1], [], []>} : vector<2x2048xf32>, vector<2048x128xf32>, vector<2x128xf32> -> vector<2x128xf32>
      %c0_14 = arith.constant 0 : index
      %c0_15 = arith.constant 0 : index
      %16 = vector.load %arg4[%c0_14, %c0_15] : memref<1x128xf32, #tpu.memory_space<vmem>>, vector<1x128xf32>
      %17 = vector.broadcast %16 : vector<1x128xf32> to vector<2x128xf32>
      %18 = arith.addf %15, %17 : vector<2x128xf32>
      %cst_16 = arith.constant 0.000000e+00 : f32
      %19 = vector.broadcast %cst_16 : f32 to vector<2x128xf32>
      %20 = arith.maximumf %18, %19 : vector<2x128xf32>
      %c0_17 = arith.constant 0 : index
      %c0_18 = arith.constant 0 : index
      %21 = vector.load %arg5[%c0_17, %c0_18] : memref<128x128xf32, #tpu.memory_space<vmem>>, vector<128x128xf32>
      %cst_19 = arith.constant dense<0.000000e+00> : vector<2x128xf32>
      %22 = tpu.matmul %20, %21, %cst_19 {dimension_numbers = #tpu.dot_dimension_numbers<[1], [0], [0], [1], [0, 0, 1, 1], [], []>} : vector<2x128xf32>, vector<128x128xf32>, vector<2x128xf32> -> vector<2x128xf32>
      %c0_20 = arith.constant 0 : index
      %c0_21 = arith.constant 0 : index
      %23 = vector.load %arg6[%c0_20, %c0_21] : memref<1x128xf32, #tpu.memory_space<vmem>>, vector<1x128xf32>
      %24 = vector.broadcast %23 : vector<1x128xf32> to vector<2x128xf32>
      %25 = arith.addf %22, %24 : vector<2x128xf32>
      %cst_22 = arith.constant 0.000000e+00 : f32
      %26 = vector.broadcast %cst_22 : f32 to vector<2x128xf32>
      %27 = arith.maximumf %25, %26 : vector<2x128xf32>
      %c0_23 = arith.constant 0 : index
      %c0_24 = arith.constant 0 : index
      %28 = vector.load %arg7[%c0_23, %c0_24] : memref<128x128xf32, #tpu.memory_space<vmem>>, vector<128x128xf32>
      %cst_25 = arith.constant dense<0.000000e+00> : vector<2x128xf32>
      %29 = tpu.matmul %27, %28, %cst_25 {dimension_numbers = #tpu.dot_dimension_numbers<[1], [0], [0], [1], [0, 0, 1, 1], [], []>} : vector<2x128xf32>, vector<128x128xf32>, vector<2x128xf32> -> vector<2x128xf32>
      %c0_26 = arith.constant 0 : index
      %c0_27 = arith.constant 0 : index
      %30 = vector.load %arg8[%c0_26, %c0_27] : memref<1x128xf32, #tpu.memory_space<vmem>>, vector<1x128xf32>
      %31 = vector.broadcast %30 : vector<1x128xf32> to vector<2x128xf32>
      %32 = arith.addf %29, %31 : vector<2x128xf32>
      %c0_28 = arith.constant 0 : index
      %c0_29 = arith.constant 0 : index
      %33 = vector.load %arg9[%c0_28, %c0_29] : memref<2x128xf32, #tpu.memory_space<vmem>>, vector<2x128xf32>
      tpu.vector_store %arg9[%c0_28, %c0_29], %32 {strides = array<i32>} : memref<2x128xf32, #tpu.memory_space<vmem>>, vector<2x128xf32>,
    } else {
    }
    return
  }
  func.func @transform_0(%arg0: i32, %arg1: i32) -> (i32, i32, i32) {
    %c0_i32 = arith.constant 0 : i32
    %c0_i32_0 = arith.constant 0 : i32
    return %arg0, %arg1, %c0_i32 : i32, i32, i32
  }
  func.func @transform_1(%arg0: i32, %arg1: i32) -> (i32, i32) {
    %c0_i32 = arith.constant 0 : i32
    %c0_i32_0 = arith.constant 0 : i32
    %c0_i32_1 = arith.constant 0 : i32
    return %c0_i32, %c0_i32_0 : i32, i32
  }
  func.func @transform_2(%arg0: i32, %arg1: i32) -> (i32, i32) {
    %c0_i32 = arith.constant 0 : i32
    %c0_i32_0 = arith.constant 0 : i32
    %c0_i32_1 = arith.constant 0 : i32
    return %c0_i32, %c0_i32_0 : i32, i32
  }
  func.func @transform_3(%arg0: i32, %arg1: i32) -> (i32, i32) {
    %c0_i32 = arith.constant 0 : i32
    %c0_i32_0 = arith.constant 0 : i32
    %c0_i32_1 = arith.constant 0 : i32
    return %c0_i32, %c0_i32_0 : i32, i32
  }
  func.func @transform_4(%arg0: i32, %arg1: i32) -> (i32, i32) {
    %c0_i32 = arith.constant 0 : i32
    %c0_i32_0 = arith.constant 0 : i32
    %c0_i32_1 = arith.constant 0 : i32
    return %c0_i32, %c0_i32_0 : i32, i32
  }
  func.func @transform_5(%arg0: i32, %arg1: i32) -> (i32, i32) {
    %c0_i32 = arith.constant 0 : i32
    %c0_i32_0 = arith.constant 0 : i32
    %c0_i32_1 = arith.constant 0 : i32
    return %c0_i32, %c0_i32_0 : i32, i32
  }
  func.func @transform_6(%arg0: i32, %arg1: i32) -> (i32, i32) {
    %c0_i32 = arith.constant 0 : i32
    %c0_i32_0 = arith.constant 0 : i32
    %c0_i32_1 = arith.constant 0 : i32
    return %c0_i32, %c0_i32_0 : i32, i32
  }
  func.func @transform_7(%arg0: i32, %arg1: i32) -> (i32, i32) {
    %c0_i32 = arith.constant 0 : i32
    %c0_i32_0 = arith.constant 0 : i32
    return %arg0, %c0_i32 : i32, i32
  }
}

</mosaic_0001>

<llo_original>
// kernel: tpu_custom_call.1
$region0: #{tpu_custom_call.1}
  #allocation0 [shape = 'u32[]', space=smem, size = 0x4, offset = 0x4, fixed_abs, tag = 'smem constant byte address 0x4 - core index']
  #allocation1 [shape = 'u32[144,128]{1,0:T(1,128)}', space=vmem, size = 0x12000, scoped, tag = 'internal scratch']
  #allocation2 [shape = 'f32[2,2048]{1,0:T(2,128)}', space=vmem, size = 0x4000, scoped, tag = 'scratch operand']
  %s0 = inlined_call_operand.hbm [shape: f32[2,16,2048], index: 0, kind: input, shape index: {}]
  %s1 = inlined_call_operand.hbm [shape: f32[2048,128], index: 1, kind: input, shape index: {}]
  %s2 = inlined_call_operand.vmem [shape: f32[1,128], index: 2, kind: input, shape index: {}]
  %s3 = inlined_call_operand.hbm [shape: f32[128,128], index: 3, kind: input, shape index: {}]
  %s4 = inlined_call_operand.vmem [shape: f32[1,128], index: 4, kind: input, shape index: {}]
  %s5 = inlined_call_operand.hbm [shape: f32[128,128], index: 5, kind: input, shape index: {}]
  %s6 = inlined_call_operand.vmem [shape: f32[1,128], index: 6, kind: input, shape index: {}]
  %s7 = inlined_call_operand.hbm [shape: f32[2,128], index: 7, kind: output, shape index: {}]
  %s8 = sld [smem:[#allocation0]]
  $region85: #{tpu_custom_call.1} parent=0
    _
  %s10 = ssub.s32 1, %s8
  %s11 = scalar_select 0, %s10, %s8
  $region1: #{tpu_custom_call.1} parent=0
    #allocation3 [shape = 'u8[262144]{0}', space=vmem, size = 0x40000, scoped, tag = 'input window, operand 0']
    #allocation4 [shape = 's32[2]{0}', space=sflag, size = 0x8, scoped, tag = 'scoped memory for tpu_custom_call.1']
    #allocation5 [shape = 's32[2]{0}', space=sflag, size = 0x8, scoped, tag = 'scoped memory for tpu_custom_call.1']
    #allocation6 [shape = 'u8[1048576]{0}', space=vmem, size = 0x100000, scoped, tag = 'input window, operand 1, single buffered']
    #allocation7 [shape = 's32[1]{0}', space=sflag, size = 0x4, scoped, tag = 'scoped memory for tpu_custom_call.1']
    #allocation8 [shape = 'u8[65536]{0}', space=vmem, size = 0x10000, scoped, tag = 'input window, operand 3, single buffered']
    #allocation9 [shape = 'u8[65536]{0}', space=vmem, size = 0x10000, scoped, tag = 'input window, operand 5, single buffered']
    #allocation10 [shape = 's32[1]{0}', space=sflag, size = 0x4, scoped, tag = 'scoped memory for tpu_custom_call.1']
    #allocation11 [shape = 'u8[1024]{0}', space=vmem, size = 0x400, scoped, tag = 'output window, operand 0, single buffered']
    %12 = vsyncpa [#allocation4], 0
    %s13 = scalar_lea.sflag [#allocation4], 1
    %14 = vsyncpa %s13, 0
    %15 = vsyncpa [#allocation7], 0
    %16 = vsyncpa [#allocation10], 0
    %17 = vsyncpa [#allocation5], 0
    loop: start=0, step=1, limit=4
    $region2: #{tpu_custom_call.1} parent=1 // loop_pre_header
      _
    $region3: #{tpu_custom_call.1} parent=1 // loop_header
      %s19 = sphi 0, %s23
      %p20 = scmp.ge.s32.totalorder %s19, 4
      %s26 = sphi 0, %s38
      %s27 = sphi 0, %s34
      %s28 = sphi 0, %s26
      %s29 = sphi 0, %s27
      %s30 = sphi 0, %s28
      %s31 = sphi 0, %s29
      %s43 = sphi 0, %s45
      %s46 = sphi 0, %s43
      %s47 = sphi 0, %s46
      %s63 = sphi 0, %s47
      %s67 = sphi 0, %s67
      %s69 = sphi 0, %s67
      %s70 = sphi 0, %s69
      %s84 = sphi 0, %s70
      %s88 = sphi 0, %s88
      %s90 = sphi 0, %s88
      %s91 = sphi 0, %s90
      %s105 = sphi 0, %s91
      %s109 = sphi 0, %s109
      %s111 = sphi 0, %s109
      %s112 = sphi 0, %s111
      %s126 = sphi 0, %s112
      %s130 = sphi 0, %s130
      %s132 = sphi 0, %s130
      %s133 = sphi 0, %s132
      %s147 = sphi 0, %s133
      %s151 = sphi 0, %s151
      %s153 = sphi 0, %s151
      %s154 = sphi 0, %s153
      %s168 = sphi 0, %s154
      %s172 = sphi 0, %s172
      %s174 = sphi 0, %s172
      %s175 = sphi 0, %s174
      %s189 = sphi 0, %s175
      %s195 = sphi 0, %s197
      %s198 = sphi 0, %s195
      %s199 = sphi 0, %s198
      %s215 = sphi 0, %s199
    $region4: #{tpu_custom_call.1} parent=1 // loop_header_branch
      %22 = sbr.rel (%p20) target = $region8
    $region5: #{tpu_custom_call.1} parent=1 // loop_body
      %s24 = ssub.s32 %s19, 1
      %s25 = ssub.s32 %s19, 2
      %s32 = sadd.s32 1, %s27
      %p33 = scmp.ge.s32.totalorder %s32, 2
      %s34 = scalar_select %p33, 0, %s32
      %s35 = sadd.s32 1, %s26
      %s36 = scalar_select %p33, %s35, %s26
      %p37 = scmp.ge.s32.totalorder %s36, 1
      %s38 = scalar_select %p37, 0, %s36
      %s39 = ssub.s32 %s26, %s38
      %s40 = ssub.s32 %s27, %s34
      %s41 = sor.u32 %s39, %s40
      %p42 = scmp.eq.s32.totalorder %s41, 0
      %s44 = sadd.s32 %s43, 1
      %s45 = scalar_select %p42, %s43, %s44
      %p48 = pneg %p42
      %p49 = scmp.eq.s32.totalorder %s19, 1
      %p50 = por %p48, %p49
      %p51 = scmp.ne.s32.totalorder %s43, %s46
      %p52 = scmp.eq.s32.totalorder %s19, 0
      %p53 = por %p51, %p52
      %p54 = scmp.ne.s32.totalorder %s43, %s46
      %p55 = scmp.eq.s32.totalorder %s24, 1
      %p56 = por %p54, %p55
      %p57 = scmp.ne.s32.totalorder %s46, %s47
      %p58 = scmp.eq.s32.totalorder %s24, 0
      %p59 = por %p57, %p58
      %p60 = scmp.ne.s32.totalorder %s46, %s47
      %p61 = scmp.eq.s32.totalorder %s25, 1
      %p62 = por %p60, %p61
      %p64 = scmp.ne.s32.totalorder %s47, %s63
      %p65 = scmp.eq.s32.totalorder %s25, 0
      %p66 = por %p64, %p65
      %s68 = sadd.s32 %s67, 1
      %p71 = scmp.eq.s32.totalorder %s19, 1
      %p72 = scmp.ne.s32.totalorder %s67, %s69
      %p73 = scmp.eq.s32.totalorder %s19, 0
      %p74 = por %p72, %p73
      %p75 = scmp.ne.s32.totalorder %s67, %s69
      %p76 = scmp.eq.s32.totalorder %s24, 1
      %p77 = por %p75, %p76
      %p78 = scmp.ne.s32.totalorder %s69, %s70
      %p79 = scmp.eq.s32.totalorder %s24, 0
      %p80 = por %p78, %p79
      %p81 = scmp.ne.s32.totalorder %s69, %s70
      %p82 = scmp.eq.s32.totalorder %s25, 1
      %p83 = por %p81, %p82
      %p85 = scmp.ne.s32.totalorder %s70, %s84
      %p86 = scmp.eq.s32.totalorder %s25, 0
      %p87 = por %p85, %p86
      %s89 = sadd.s32 %s88, 1
      %p92 = scmp.eq.s32.totalorder %s19, 1
      %p93 = scmp.ne.s32.totalorder %s88, %s90
      %p94 = scmp.eq.s32.totalorder %s19, 0
      %p95 = por %p93, %p94
      %p96 = scmp.ne.s32.totalorder %s88, %s90
      %p97 = scmp.eq.s32.totalorder %s24, 1
      %p98 = por %p96, %p97
      %p99 = scmp.ne.s32.totalorder %s90, %s91
      %p100 = scmp.eq.s32.totalorder %s24, 0
      %p101 = por %p99, %p100
      %p102 = scmp.ne.s32.totalorder %s90, %s91
      %p103 = scmp.eq.s32.totalorder %s25, 1
      %p104 = por %p102, %p103
      %p106 = scmp.ne.s32.totalorder %s91, %s105
      %p107 = scmp.eq.s32.totalorder %s25, 0
      %p108 = por %p106, %p107
      %s110 = sadd.s32 %s109, 1
      %p113 = scmp.eq.s32.totalorder %s19, 1
      %p114 = scmp.ne.s32.totalorder %s109, %s111
      %p115 = scmp.eq.s32.totalorder %s19, 0
      %p116 = por %p114, %p115
      %p117 = scmp.ne.s32.totalorder %s109, %s111
      %p118 = scmp.eq.s32.totalorder %s24, 1
      %p119 = por %p117, %p118
      %p120 = scmp.ne.s32.totalorder %s111, %s112
      %p121 = scmp.eq.s32.totalorder %s24, 0
      %p122 = por %p120, %p121
      %p123 = scmp.ne.s32.totalorder %s111, %s112
      %p124 = scmp.eq.s32.totalorder %s25, 1
      %p125 = por %p123, %p124
      %p127 = scmp.ne.s32.totalorder %s112, %s126
      %p128 = scmp.eq.s32.totalorder %s25, 0
      %p129 = por %p127, %p128
      %s131 = sadd.s32 %s130, 1
      %p134 = scmp.eq.s32.totalorder %s19, 1
      %p135 = scmp.ne.s32.totalorder %s130, %s132
      %p136 = scmp.eq.s32.totalorder %s19, 0
      %p137 = por %p135, %p136
      %p138 = scmp.ne.s32.totalorder %s130, %s132
      %p139 = scmp.eq.s32.totalorder %s24, 1
      %p140 = por %p138, %p139
      %p141 = scmp.ne.s32.totalorder %s132, %s133
      %p142 = scmp.eq.s32.totalorder %s24, 0
      %p143 = por %p141, %p142
      %p144 = scmp.ne.s32.totalorder %s132, %s133
      %p145 = scmp.eq.s32.totalorder %s25, 1
      %p146 = por %p144, %p145
      %p148 = scmp.ne.s32.totalorder %s133, %s147
      %p149 = scmp.eq.s32.totalorder %s25, 0
      %p150 = por %p148, %p149
      %s152 = sadd.s32 %s151, 1
      %p155 = scmp.eq.s32.totalorder %s19, 1
      %p156 = scmp.ne.s32.totalorder %s151, %s153
      %p157 = scmp.eq.s32.totalorder %s19, 0
      %p158 = por %p156, %p157
      %p159 = scmp.ne.s32.totalorder %s151, %s153
      %p160 = scmp.eq.s32.totalorder %s24, 1
      %p161 = por %p159, %p160
      %p162 = scmp.ne.s32.totalorder %s153, %s154
      %p163 = scmp.eq.s32.totalorder %s24, 0
      %p164 = por %p162, %p163
      %p165 = scmp.ne.s32.totalorder %s153, %s154
      %p166 = scmp.eq.s32.totalorder %s25, 1
      %p167 = por %p165, %p166
      %p169 = scmp.ne.s32.totalorder %s154, %s168
      %p170 = scmp.eq.s32.totalorder %s25, 0
      %p171 = por %p169, %p170
      %s173 = sadd.s32 %s172, 1
      %p176 = scmp.eq.s32.totalorder %s19, 1
      %p177 = scmp.ne.s32.totalorder %s172, %s174
      %p178 = scmp.eq.s32.totalorder %s19, 0
      %p179 = por %p177, %p178
      %p180 = scmp.ne.s32.totalorder %s172, %s174
      %p181 = scmp.eq.s32.totalorder %s24, 1
      %p182 = por %p180, %p181
      %p183 = scmp.ne.s32.totalorder %s174, %s175
      %p184 = scmp.eq.s32.totalorder %s24, 0
      %p185 = por %p183, %p184
      %p186 = scmp.ne.s32.totalorder %s174, %s175
      %p187 = scmp.eq.s32.totalorder %s25, 1
      %p188 = por %p186, %p187
      %p190 = scmp.ne.s32.totalorder %s175, %s189
      %p191 = scmp.eq.s32.totalorder %s25, 0
      %p192 = por %p190, %p191
      %s193 = ssub.s32 %s26, %s38
      %p194 = scmp.eq.s32.totalorder %s193, 0
      %s196 = sadd.s32 %s195, 1
      %s197 = scalar_select %p194, %s195, %s196
      %p200 = pneg %p194
      %p201 = scmp.eq.s32.totalorder %s19, 1
      %p202 = por %p200, %p201
      %p203 = scmp.ne.s32.totalorder %s195, %s198
      %p204 = scmp.eq.s32.totalorder %s19, 0
      %p205 = por %p203, %p204
      %p206 = scmp.ne.s32.totalorder %s195, %s198
      %p207 = scmp.eq.s32.totalorder %s24, 1
      %p208 = por %p206, %p207
      %p209 = scmp.ne.s32.totalorder %s198, %s199
      %p210 = scmp.eq.s32.totalorder %s24, 0
      %p211 = por %p209, %p210
      %p212 = scmp.ne.s32.totalorder %s198, %s199
      %p213 = scmp.eq.s32.totalorder %s25, 1
      %p214 = por %p212, %p213
      %p216 = scmp.ne.s32.totalorder %s199, %s215
      %p217 = scmp.eq.s32.totalorder %s25, 0
      %p218 = por %p216, %p217
      %p219 = scmp.le.s32.totalorder 1, %s19
      %p220 = scmp.lt.s32.totalorder %s19, 3
      %p221 = pnand %p219, %p220
      %p222 = pneg %p221
      // Predicated region
      $region9: #{tpu_custom_call.1} parent=5 // pred_check
        _
      $region10: #{tpu_custom_call.1} parent=5 // pred_check_branch
        %224 = sbr.rel (%p221) target = $region12
      $region11: #{tpu_custom_call.1} parent=5 // pred_region
        %s225 = ssub.s32 %s19, 1
        // Predicated region
        $region13: #{tpu_custom_call.1} parent=11 // pred_check
          %p226 = pneg %p80
        $region14: #{tpu_custom_call.1} parent=11 // pred_check_branch
          %228 = sbr.rel (%p226) target = $region16
        $region15: #{tpu_custom_call.1} parent=11 // pred_region
          %s230 = ssub.s32 32768, 32768
          %231 = vsyncadd [#allocation7], %s230
          %s232 = sshll.u32 [#allocation6], 4
          %s233 = int_to_ptr.vmem [resolvable:$true] %s232
          %238 = dma.hbm_to_vmem [thread:$0]  %s1, 32768, %s233, [#allocation7], 128, 128, 8
        $region16: #{tpu_custom_call.1} parent=11 // pred_fallthru
          _
        // Predicated region
        $region17: #{tpu_custom_call.1} parent=11 // pred_check
          %p239 = pneg %p101
        $region18: #{tpu_custom_call.1} parent=11 // pred_check_branch
          %241 = sbr.rel (%p239) target = $region20
        $region19: #{tpu_custom_call.1} parent=11 // pred_region
          _
        $region20: #{tpu_custom_call.1} parent=11 // pred_fallthru
          _
        // Predicated region
        $region21: #{tpu_custom_call.1} parent=11 // pred_check
          %p242 = pneg %p122
        $region22: #{tpu_custom_call.1} parent=11 // pred_check_branch
          %244 = sbr.rel (%p242) target = $region24
        $region23: #{tpu_custom_call.1} parent=11 // pred_region
          %s246 = ssub.s32 2048, 2048
          %247 = vsyncadd [#allocation7], %s246
          %s248 = sshll.u32 [#allocation8], 4
          %s249 = int_to_ptr.vmem [resolvable:$true] %s248
          %254 = dma.hbm_to_vmem [thread:$0]  %s3, 2048, %s249, [#allocation7], 128, 128, 8
        $region24: #{tpu_custom_call.1} parent=11 // pred_fallthru
          _
        // Predicated region
        $region25: #{tpu_custom_call.1} parent=11 // pred_check
          %p255 = pneg %p143
        $region26: #{tpu_custom_call.1} parent=11 // pred_check_branch
          %257 = sbr.rel (%p255) target = $region28
        $region27: #{tpu_custom_call.1} parent=11 // pred_region
          _
        $region28: #{tpu_custom_call.1} parent=11 // pred_fallthru
          _
        // Predicated region
        $region29: #{tpu_custom_call.1} parent=11 // pred_check
          %p258 = pneg %p164
        $region30: #{tpu_custom_call.1} parent=11 // pred_check_branch
          %260 = sbr.rel (%p258) target = $region32
        $region31: #{tpu_custom_call.1} parent=11 // pred_region
          %s262 = ssub.s32 2048, 2048
          %263 = vsyncadd [#allocation10], %s262
          %s264 = sshll.u32 [#allocation9], 4
          %s265 = int_to_ptr.vmem [resolvable:$true] %s264
          %270 = dma.hbm_to_vmem [thread:$0]  %s5, 2048, %s265, [#allocation10], 128, 128, 8
        $region32: #{tpu_custom_call.1} parent=11 // pred_fallthru
          _
        // Predicated region
        $region33: #{tpu_custom_call.1} parent=11 // pred_check
          %p271 = pneg %p185
        $region34: #{tpu_custom_call.1} parent=11 // pred_check_branch
          %273 = sbr.rel (%p271) target = $region36
        $region35: #{tpu_custom_call.1} parent=11 // pred_region
          _
        $region36: #{tpu_custom_call.1} parent=11 // pred_fallthru
          _
      $region12: #{tpu_custom_call.1} parent=5 // pred_fallthru
        _
      %p274 = scmp.lt.s32.totalorder %s19, 2
      // Predicated region
      $region37: #{tpu_custom_call.1} parent=5 // pred_check
        %p275 = pneg %p274
      $region38: #{tpu_custom_call.1} parent=5 // pred_check_branch
        %277 = sbr.rel (%p275) target = $region40
      $region39: #{tpu_custom_call.1} parent=5 // pred_region
        // Predicated region
        $region41: #{tpu_custom_call.1} parent=39 // pred_check
          %p278 = pneg %p53
        $region42: #{tpu_custom_call.1} parent=39 // pred_check_branch
          %280 = sbr.rel (%p278) target = $region44
        $region43: #{tpu_custom_call.1} parent=39 // pred_region
          %s281 = sand.u32 %s43, 1
          %s282 = scalar_lea.sflag [#allocation4], %s281
          %s283 = sand.u32 %s43, 1
          %s284 = smul.addr %s283, 256
          %s285 = scalar_lea.vmem [#allocation3], %s284
          %s286 = smul.u32 2, %s26
          %s288 = ssub.s32 4096, 4096
          %289 = vsyncadd %s282, %s288
          %s290 = smul.addr %s27, 16
          %s291 = smul.addr %s286, 32
          %s292 = sadd.s32 %s290, %s291
          %s293 = smul.addr %s292, 128
          %s294 = scalar_lea.hbm %s0, %s293
          %s295 = sshll.u32 %s285, 4
          %s296 = int_to_ptr.vmem [resolvable:$true] %s295
          %301 = dma.hbm_to_vmem [thread:$0]  %s294, 4096, %s296, %s282, 4096, 2048, 128
        $region44: #{tpu_custom_call.1} parent=39 // pred_fallthru
          _
      $region40: #{tpu_custom_call.1} parent=5 // pred_fallthru
        _
      %p302 = scmp.le.s32.totalorder 1, %s19
      %p303 = scmp.lt.s32.totalorder %s19, 3
      %p304 = pnand %p302, %p303
      %p305 = pneg %p304
      // Predicated region
      $region45: #{tpu_custom_call.1} parent=5 // pred_check
        _
      $region46: #{tpu_custom_call.1} parent=5 // pred_check_branch
        %307 = sbr.rel (%p304) target = $region48
      $region47: #{tpu_custom_call.1} parent=5 // pred_region
        %s308 = ssub.s32 %s19, 1
        %s309 = sand.u32 %s46, 1
        %s310 = scalar_lea.sflag [#allocation4], %s309
        %s311 = sand.u32 %s46, 1
        %s312 = smul.addr %s311, 256
        %s313 = scalar_lea.vmem [#allocation3], %s312
        // Predicated region
        $region49: #{tpu_custom_call.1} parent=47 // pred_check
          %p314 = pneg %p59
        $region50: #{tpu_custom_call.1} parent=47 // pred_check_branch
          %316 = sbr.rel (%p314) target = $region52
        $region51: #{tpu_custom_call.1} parent=47 // pred_region
          %317 = dma.done %s310, 4096
        $region52: #{tpu_custom_call.1} parent=47 // pred_fallthru
          _
        // Predicated region
        $region53: #{tpu_custom_call.1} parent=47 // pred_check
          %p318 = pneg %p80
        $region54: #{tpu_custom_call.1} parent=47 // pred_check_branch
          %320 = sbr.rel (%p318) target = $region56
        $region55: #{tpu_custom_call.1} parent=47 // pred_region
          %321 = dma.done [#allocation7], 32768
        $region56: #{tpu_custom_call.1} parent=47 // pred_fallthru
          _
        // Predicated region
        $region57: #{tpu_custom_call.1} parent=47 // pred_check
          %p322 = pneg %p122
        $region58: #{tpu_custom_call.1} parent=47 // pred_check_branch
          %324 = sbr.rel (%p322) target = $region60
        $region59: #{tpu_custom_call.1} parent=47 // pred_region
          %325 = dma.done [#allocation7], 2048
        $region60: #{tpu_custom_call.1} parent=47 // pred_fallthru
          _
        // Predicated region
        $region61: #{tpu_custom_call.1} parent=47 // pred_check
          %p326 = pneg %p164
        $region62: #{tpu_custom_call.1} parent=47 // pred_check_branch
          %328 = sbr.rel (%p326) target = $region64
        $region63: #{tpu_custom_call.1} parent=47 // pred_region
          %329 = dma.done [#allocation10], 2048
        $region64: #{tpu_custom_call.1} parent=47 // pred_fallthru
          _
        %s330 = sand.u32 %s46, 1
        %s331 = scalar_lea.sflag [#allocation4], %s330
        %s332 = sand.u32 %s46, 1
        %s333 = smul.addr %s332, 256
        %s334 = scalar_lea.vmem [#allocation3], %s333
        %p335 = pneg %p59
        %p336 = pneg %p56
        %p337 = pneg %p80
        %p338 = pneg %p77
        %p339 = pneg %p101
        %p340 = pneg %p98
        %p341 = pneg %p122
        %p342 = pneg %p119
        %p343 = pneg %p143
        %p344 = pneg %p140
        %p345 = pneg %p164
        %p346 = pneg %p161
        %p347 = pneg %p185
        %p348 = pneg %p182
        %p349 = pneg %p211
        %p350 = pneg %p208
        %s351 = smul.u32 2, %s28
        %p352 = scmp.eq.s32.totalorder %s29, 0
        // Predicated region
        $region65: #{tpu_custom_call.1} parent=47 // pred_check
          %p353 = pneg %p352
        $region66: #{tpu_custom_call.1} parent=47 // pred_check_branch
          %355 = sbr.rel (%p353) target = $region68
        $region67: #{tpu_custom_call.1} parent=47 // pred_region
          %356 = vst [vmem:[#allocation2] sm:$0xff] 0.0
          %357 = vst [vmem:[#allocation2 + $0x8] sm:$0xff] 0.0
          %358 = vst [vmem:[#allocation2 + $0x10] sm:$0xff] 0.0
          %359 = vst [vmem:[#allocation2 + $0x18] sm:$0xff] 0.0
        $region68: #{tpu_custom_call.1} parent=47 // pred_fallthru
          _
        %v360 = vld [vmem:[#allocation2] sm:$0xff]
        %v361 = vld [vmem:[#allocation2 + $0x8] sm:$0xff]
        %v362 = vld [vmem:[#allocation2 + $0x10] sm:$0xff]
        %v363 = vld [vmem:[#allocation2 + $0x18] sm:$0xff]
        %v364 = vld [vmem:[%s313] sm:$0xff]
        %v365 = vld [vmem:[%s313 + $0x8] sm:$0xff]
        %v366 = vld [vmem:[%s313 + $0x10] sm:$0xff]
        %v367 = vld [vmem:[%s313 + $0x18] sm:$0xff]
        %v368 = vld [vmem:[%s313 + $0x20] sm:$0xff]
        %v369 = vld [vmem:[%s313 + $0x28] sm:$0xff]
        %v370 = vld [vmem:[%s313 + $0x30] sm:$0xff]
        %v371 = vld [vmem:[%s313 + $0x38] sm:$0xff]
        %v372 = vld [vmem:[%s313 + $0x40] sm:$0xff]
        %v373 = vld [vmem:[%s313 + $0x48] sm:$0xff]
        %v374 = vld [vmem:[%s313 + $0x50] sm:$0xff]
        %v375 = vld [vmem:[%s313 + $0x58] sm:$0xff]
        %v376 = vld [vmem:[%s313 + $0x60] sm:$0xff]
        %v377 = vld [vmem:[%s313 + $0x68] sm:$0xff]
        %v378 = vld [vmem:[%s313 + $0x70] sm:$0xff]
        %v379 = vld [vmem:[%s313 + $0x78] sm:$0xff]
        %v380 = vld [vmem:[%s313 + $0x80] sm:$0xff]
        %v381 = vld [vmem:[%s313 + $0x88] sm:$0xff]
        %v382 = vld [vmem:[%s313 + $0x90] sm:$0xff]
        %v383 = vld [vmem:[%s313 + $0x98] sm:$0xff]
        %v384 = vld [vmem:[%s313 + $0xa0] sm:$0xff]
        %v385 = vld [vmem:[%s313 + $0xa8] sm:$0xff]
        %v386 = vld [vmem:[%s313 + $0xb0] sm:$0xff]
        %v387 = vld [vmem:[%s313 + $0xb8] sm:$0xff]
        %v388 = vld [vmem:[%s313 + $0xc0] sm:$0xff]
        %v389 = vld [vmem:[%s313 + $0xc8] sm:$0xff]
        %v390 = vld [vmem:[%s313 + $0xd0] sm:$0xff]
        %v391 = vld [vmem:[%s313 + $0xd8] sm:$0xff]
        %v392 = vld [vmem:[%s313 + $0xe0] sm:$0xff]
        %v393 = vld [vmem:[%s313 + $0xe8] sm:$0xff]
        %v394 = vld [vmem:[%s313 + $0xf0] sm:$0xff]
        %v395 = vld [vmem:[%s313 + $0xf8] sm:$0xff]
        %v396 = vrot.slane %v364, 4
        %v397 = vadd.f32 %v364, %v396
        %v398 = vrot.slane %v397, 2
        %v399 = vadd.f32 %v397, %v398
        %v400 = vrot.slane %v399, 1
        %v401 = vadd.f32 %v399, %v400
        %v402 = vrot.slane %v365, 4
        %v403 = vadd.f32 %v365, %v402
        %v404 = vrot.slane %v403, 2
        %v405 = vadd.f32 %v403, %v404
        %v406 = vrot.slane %v405, 1
        %v407 = vadd.f32 %v405, %v406
        %v408 = vrot.slane %v366, 4
        %v409 = vadd.f32 %v366, %v408
        %v410 = vrot.slane %v409, 2
        %v411 = vadd.f32 %v409, %v410
        %v412 = vrot.slane %v411, 1
        %v413 = vadd.f32 %v411, %v412
        %v414 = vrot.slane %v367, 4
        %v415 = vadd.f32 %v367, %v414
        %v416 = vrot.slane %v415, 2
        %v417 = vadd.f32 %v415, %v416
        %v418 = vrot.slane %v417, 1
        %v419 = vadd.f32 %v417, %v418
        %v420 = vrot.slane %v368, 4
        %v421 = vadd.f32 %v368, %v420
        %v422 = vrot.slane %v421, 2
        %v423 = vadd.f32 %v421, %v422
        %v424 = vrot.slane %v423, 1
        %v425 = vadd.f32 %v423, %v424
        %v426 = vrot.slane %v369, 4
        %v427 = vadd.f32 %v369, %v426
        %v428 = vrot.slane %v427, 2
        %v429 = vadd.f32 %v427, %v428
        %v430 = vrot.slane %v429, 1
        %v431 = vadd.f32 %v429, %v430
        %v432 = vrot.slane %v370, 4
        %v433 = vadd.f32 %v370, %v432
        %v434 = vrot.slane %v433, 2
        %v435 = vadd.f32 %v433, %v434
        %v436 = vrot.slane %v435, 1
        %v437 = vadd.f32 %v435, %v436
        %v438 = vrot.slane %v371, 4
        %v439 = vadd.f32 %v371, %v438
        %v440 = vrot.slane %v439, 2
        %v441 = vadd.f32 %v439, %v440
        %v442 = vrot.slane %v441, 1
        %v443 = vadd.f32 %v441, %v442
        %v444 = vrot.slane %v372, 4
        %v445 = vadd.f32 %v372, %v444
        %v446 = vrot.slane %v445, 2
        %v447 = vadd.f32 %v445, %v446
        %v448 = vrot.slane %v447, 1
        %v449 = vadd.f32 %v447, %v448
        %v450 = vrot.slane %v373, 4
        %v451 = vadd.f32 %v373, %v450
        %v452 = vrot.slane %v451, 2
        %v453 = vadd.f32 %v451, %v452
        %v454 = vrot.slane %v453, 1
        %v455 = vadd.f32 %v453, %v454
        %v456 = vrot.slane %v374, 4
        %v457 = vadd.f32 %v374, %v456
        %v458 = vrot.slane %v457, 2
        %v459 = vadd.f32 %v457, %v458
        %v460 = vrot.slane %v459, 1
        %v461 = vadd.f32 %v459, %v460
        %v462 = vrot.slane %v375, 4
        %v463 = vadd.f32 %v375, %v462
        %v464 = vrot.slane %v463, 2
        %v465 = vadd.f32 %v463, %v464
        %v466 = vrot.slane %v465, 1
        %v467 = vadd.f32 %v465, %v466
        %v468 = vrot.slane %v376, 4
        %v469 = vadd.f32 %v376, %v468
        %v470 = vrot.slane %v469, 2
        %v471 = vadd.f32 %v469, %v470
        %v472 = vrot.slane %v471, 1
        %v473 = vadd.f32 %v471, %v472
        %v474 = vrot.slane %v377, 4
        %v475 = vadd.f32 %v377, %v474
        %v476 = vrot.slane %v475, 2
        %v477 = vadd.f32 %v475, %v476
        %v478 = vrot.slane %v477, 1
        %v479 = vadd.f32 %v477, %v478
        %v480 = vrot.slane %v378, 4
        %v481 = vadd.f32 %v378, %v480
        %v482 = vrot.slane %v481, 2
        %v483 = vadd.f32 %v481, %v482
        %v484 = vrot.slane %v483, 1
        %v485 = vadd.f32 %v483, %v484
        %v486 = vrot.slane %v379, 4
        %v487 = vadd.f32 %v379, %v486
        %v488 = vrot.slane %v487, 2
        %v489 = vadd.f32 %v487, %v488
        %v490 = vrot.slane %v489, 1
        %v491 = vadd.f32 %v489, %v490
        %v492 = vrot.slane %v380, 4
        %v493 = vadd.f32 %v380, %v492
        %v494 = vrot.slane %v493, 2
        %v495 = vadd.f32 %v493, %v494
        %v496 = vrot.slane %v495, 1
        %v497 = vadd.f32 %v495, %v496
        %v498 = vrot.slane %v381, 4
        %v499 = vadd.f32 %v381, %v498
        %v500 = vrot.slane %v499, 2
        %v501 = vadd.f32 %v499, %v500
        %v502 = vrot.slane %v501, 1
        %v503 = vadd.f32 %v501, %v502
        %v504 = vrot.slane %v382, 4
        %v505 = vadd.f32 %v382, %v504
        %v506 = vrot.slane %v505, 2
        %v507 = vadd.f32 %v505, %v506
        %v508 = vrot.slane %v507, 1
        %v509 = vadd.f32 %v507, %v508
        %v510 = vrot.slane %v383, 4
        %v511 = vadd.f32 %v383, %v510
        %v512 = vrot.slane %v511, 2
        %v513 = vadd.f32 %v511, %v512
        %v514 = vrot.slane %v513, 1
        %v515 = vadd.f32 %v513, %v514
        %v516 = vrot.slane %v384, 4
        %v517 = vadd.f32 %v384, %v516
        %v518 = vrot.slane %v517, 2
        %v519 = vadd.f32 %v517, %v518
        %v520 = vrot.slane %v519, 1
        %v521 = vadd.f32 %v519, %v520
        %v522 = vrot.slane %v385, 4
        %v523 = vadd.f32 %v385, %v522
        %v524 = vrot.slane %v523, 2
        %v525 = vadd.f32 %v523, %v524
        %v526 = vrot.slane %v525, 1
        %v527 = vadd.f32 %v525, %v526
        %v528 = vrot.slane %v386, 4
        %v529 = vadd.f32 %v386, %v528
        %v530 = vrot.slane %v529, 2
        %v531 = vadd.f32 %v529, %v530
        %v532 = vrot.slane %v531, 1
        %v533 = vadd.f32 %v531, %v532
        %v534 = vrot.slane %v387, 4
        %v535 = vadd.f32 %v387, %v534
        %v536 = vrot.slane %v535, 2
        %v537 = vadd.f32 %v535, %v536
        %v538 = vrot.slane %v537, 1
        %v539 = vadd.f32 %v537, %v538
        %v540 = vrot.slane %v388, 4
        %v541 = vadd.f32 %v388, %v540
        %v542 = vrot.slane %v541, 2
        %v543 = vadd.f32 %v541, %v542
        %v544 = vrot.slane %v543, 1
        %v545 = vadd.f32 %v543, %v544
        %v546 = vrot.slane %v389, 4
        %v547 = vadd.f32 %v389, %v546
        %v548 = vrot.slane %v547, 2
        %v549 = vadd.f32 %v547, %v548
        %v550 = vrot.slane %v549, 1
        %v551 = vadd.f32 %v549, %v550
        %v552 = vrot.slane %v390, 4
        %v553 = vadd.f32 %v390, %v552
        %v554 = vrot.slane %v553, 2
        %v555 = vadd.f32 %v553, %v554
        %v556 = vrot.slane %v555, 1
        %v557 = vadd.f32 %v555, %v556
        %v558 = vrot.slane %v391, 4
        %v559 = vadd.f32 %v391, %v558
        %v560 = vrot.slane %v559, 2
        %v561 = vadd.f32 %v559, %v560
        %v562 = vrot.slane %v561, 1
        %v563 = vadd.f32 %v561, %v562
        %v564 = vrot.slane %v392, 4
        %v565 = vadd.f32 %v392, %v564
        %v566 = vrot.slane %v565, 2
        %v567 = vadd.f32 %v565, %v566
        %v568 = vrot.slane %v567, 1
        %v569 = vadd.f32 %v567, %v568
        %v570 = vrot.slane %v393, 4
        %v571 = vadd.f32 %v393, %v570
        %v572 = vrot.slane %v571, 2
        %v573 = vadd.f32 %v571, %v572
        %v574 = vrot.slane %v573, 1
        %v575 = vadd.f32 %v573, %v574
        %v576 = vrot.slane %v394, 4
        %v577 = vadd.f32 %v394, %v576
        %v578 = vrot.slane %v577, 2
        %v579 = vadd.f32 %v577, %v578
        %v580 = vrot.slane %v579, 1
        %v581 = vadd.f32 %v579, %v580
        %v582 = vrot.slane %v395, 4
        %v583 = vadd.f32 %v395, %v582
        %v584 = vrot.slane %v583, 2
        %v585 = vadd.f32 %v583, %v584
        %v586 = vrot.slane %v585, 1
        %v587 = vadd.f32 %v585, %v586
        %v620 = vcombine.low %v401, %v407
        %v621 = vcombine.low %v413, %v419
        %v623 = vunpack.c.l.s4 1983009808
        %v624 = vunpack.c.0.s8 %v623
        %v625 = vlaneseq
        %v626 = vshrl.u32 %v625, 7
        %v627 = vsub.s32 %v624, %v626
        %v628 = vrot.slane %v620, %v627
        %v630 = vunpack.c.l.s4 1983009808
        %v631 = vunpack.c.0.s8 %v630
        %v632 = vlaneseq
        %v633 = vshrl.u32 %v632, 7
        %v634 = vsub.s32 %v631, %v633
        %v635 = vrot.slane %v621, %v634
        %v636 = vcombine.low %v628, %v635
        %v637 = vcombine.low %v425, %v431
        %v638 = vcombine.low %v437, %v443
        %v640 = vunpack.c.l.s4 1983009808
        %v641 = vunpack.c.0.s8 %v640
        %v642 = vlaneseq
        %v643 = vshrl.u32 %v642, 7
        %v644 = vsub.s32 %v641, %v643
        %v645 = vrot.slane %v637, %v644
        %v647 = vunpack.c.l.s4 1983009808
        %v648 = vunpack.c.0.s8 %v647
        %v649 = vlaneseq
        %v650 = vshrl.u32 %v649, 7
        %v651 = vsub.s32 %v648, %v650
        %v652 = vrot.slane %v638, %v651
        %v653 = vcombine.low %v645, %v652
        %v654 = vcombine.low %v449, %v455
        %v655 = vcombine.low %v461, %v467
        %v657 = vunpack.c.l.s4 1983009808
        %v658 = vunpack.c.0.s8 %v657
        %v659 = vlaneseq
        %v660 = vshrl.u32 %v659, 7
        %v661 = vsub.s32 %v658, %v660
        %v662 = vrot.slane %v654, %v661
        %v664 = vunpack.c.l.s4 1983009808
        %v665 = vunpack.c.0.s8 %v664
        %v666 = vlaneseq
        %v667 = vshrl.u32 %v666, 7
        %v668 = vsub.s32 %v665, %v667
        %v669 = vrot.slane %v655, %v668
        %v670 = vcombine.low %v662, %v669
        %v671 = vcombine.low %v473, %v479
        %v672 = vcombine.low %v485, %v491
        %v674 = vunpack.c.l.s4 1983009808
        %v675 = vunpack.c.0.s8 %v674
        %v676 = vlaneseq
        %v677 = vshrl.u32 %v676, 7
        %v678 = vsub.s32 %v675, %v677
        %v679 = vrot.slane %v671, %v678
        %v681 = vunpack.c.l.s4 1983009808
        %v682 = vunpack.c.0.s8 %v681
        %v683 = vlaneseq
        %v684 = vshrl.u32 %v683, 7
        %v685 = vsub.s32 %v682, %v684
        %v686 = vrot.slane %v672, %v685
        %v687 = vcombine.low %v679, %v686
        %v688 = vcombine.low %v497, %v503
        %v689 = vcombine.low %v509, %v515
        %v691 = vunpack.c.l.s4 1983009808
        %v692 = vunpack.c.0.s8 %v691
        %v693 = vlaneseq
        %v694 = vshrl.u32 %v693, 7
        %v695 = vsub.s32 %v692, %v694
        %v696 = vrot.slane %v688, %v695
        %v698 = vunpack.c.l.s4 1983009808
        %v699 = vunpack.c.0.s8 %v698
        %v700 = vlaneseq
        %v701 = vshrl.u32 %v700, 7
        %v702 = vsub.s32 %v699, %v701
        %v703 = vrot.slane %v689, %v702
        %v704 = vcombine.low %v696, %v703
        %v705 = vcombine.low %v521, %v527
        %v706 = vcombine.low %v533, %v539
        %v708 = vunpack.c.l.s4 1983009808
        %v709 = vunpack.c.0.s8 %v708
        %v710 = vlaneseq
        %v711 = vshrl.u32 %v710, 7
        %v712 = vsub.s32 %v709, %v711
        %v713 = vrot.slane %v705, %v712
        %v715 = vunpack.c.l.s4 1983009808
        %v716 = vunpack.c.0.s8 %v715
        %v717 = vlaneseq
        %v718 = vshrl.u32 %v717, 7
        %v719 = vsub.s32 %v716, %v718
        %v720 = vrot.slane %v706, %v719
        %v721 = vcombine.low %v713, %v720
        %v722 = vcombine.low %v545, %v551
        %v723 = vcombine.low %v557, %v563
        %v725 = vunpack.c.l.s4 1983009808
        %v726 = vunpack.c.0.s8 %v725
        %v727 = vlaneseq
        %v728 = vshrl.u32 %v727, 7
        %v729 = vsub.s32 %v726, %v728
        %v730 = vrot.slane %v722, %v729
        %v732 = vunpack.c.l.s4 1983009808
        %v733 = vunpack.c.0.s8 %v732
        %v734 = vlaneseq
        %v735 = vshrl.u32 %v734, 7
        %v736 = vsub.s32 %v733, %v735
        %v737 = vrot.slane %v723, %v736
        %v738 = vcombine.low %v730, %v737
        %v739 = vcombine.low %v569, %v575
        %v740 = vcombine.low %v581, %v587
        %v742 = vunpack.c.l.s4 1983009808
        %v743 = vunpack.c.0.s8 %v742
        %v744 = vlaneseq
        %v745 = vshrl.u32 %v744, 7
        %v746 = vsub.s32 %v743, %v745
        %v747 = vrot.slane %v739, %v746
        %v749 = vunpack.c.l.s4 1983009808
        %v750 = vunpack.c.0.s8 %v749
        %v751 = vlaneseq
        %v752 = vshrl.u32 %v751, 7
        %v753 = vsub.s32 %v750, %v752
        %v754 = vrot.slane %v740, %v753
        %v755 = vcombine.low %v747, %v754
        %vm756 = vcmask 1044484
        %v757 = vsel %vm756, %v636, %v636
        %vm758 = vcmask 1046534
        %v759 = vsel %vm758, %v636, %v757
        %v760 = vrot.slane %v704, 7
        %vm761 = vcmask 1041409
        %v762 = vsel %vm761, %v760, %v759
        %vm763 = vcmask 1043459
        %v764 = vsel %vm763, %v760, %v762
        %vm765 = vcmask 1045509
        %v766 = vsel %vm765, %v760, %v764
        %vm767 = vcmask 1047559
        %v768 = vsel %vm767, %v760, %v766
        %v769 = vsel %vm756, %v653, %v653
        %v770 = vsel %vm758, %v653, %v769
        %v771 = vrot.slane %v721, 7
        %v772 = vsel %vm761, %v771, %v770
        %v773 = vsel %vm763, %v771, %v772
        %v774 = vsel %vm765, %v771, %v773
        %v775 = vsel %vm767, %v771, %v774
        %v776 = vsel %vm756, %v670, %v670
        %v777 = vsel %vm758, %v670, %v776
        %v778 = vrot.slane %v738, 7
        %v779 = vsel %vm761, %v778, %v777
        %v780 = vsel %vm763, %v778, %v779
        %v781 = vsel %vm765, %v778, %v780
        %v782 = vsel %vm767, %v778, %v781
        %v783 = vsel %vm756, %v687, %v687
        %v784 = vsel %vm758, %v687, %v783
        %v785 = vrot.slane %v755, 7
        %v786 = vsel %vm761, %v785, %v784
        %v787 = vsel %vm763, %v785, %v786
        %v788 = vsel %vm765, %v785, %v787
        %v789 = vsel %vm767, %v785, %v788
        %v794 = vadd.f32 %v360, %v768
        %v795 = vadd.f32 %v361, %v775
        %v796 = vadd.f32 %v362, %v782
        %v797 = vadd.f32 %v363, %v789
        %798 = vst [vmem:[#allocation2] sm:$0xff] %v794
        %799 = vst [vmem:[#allocation2 + $0x8] sm:$0xff] %v795
        %800 = vst [vmem:[#allocation2 + $0x10] sm:$0xff] %v796
        %801 = vst [vmem:[#allocation2 + $0x18] sm:$0xff] %v797
        %p802 = scmp.eq.s32.totalorder %s29, 1
        // Predicated region
        $region69: #{tpu_custom_call.1} parent=47 // pred_check
          %p803 = pneg %p802
        $region70: #{tpu_custom_call.1} parent=47 // pred_check_branch
          %805 = sbr.rel (%p803) target = $region72
        $region71: #{tpu_custom_call.1} parent=47 // pred_region
          %v806 = vld [vmem:[#allocation2] sm:$0xff]
          %v807 = vld [vmem:[#allocation2 + $0x8] sm:$0xff]
          %v808 = vld [vmem:[#allocation2 + $0x10] sm:$0xff]
          %v809 = vld [vmem:[#allocation2 + $0x18] sm:$0xff]
          %v810 = vmul.f32 %v806, 0.0625
          %v811 = vmul.f32 %v807, 0.0625
          %v812 = vmul.f32 %v808, 0.0625
          %v813 = vmul.f32 %v809, 0.0625
          %v814 = vld [vmem:[#allocation6] sm:$0xff]
          %v815 = vld [vmem:[#allocation6 + $0x8] sm:$0xff]
          %v816 = vld [vmem:[#allocation6 + $0x10] sm:$0xff]
          %v817 = vld [vmem:[#allocation6 + $0x18] sm:$0xff]
          %v818 = vld [vmem:[#allocation6 + $0x20] sm:$0xff]
          %v819 = vld [vmem:[#allocation6 + $0x28] sm:$0xff]
          %v820 = vld [vmem:[#allocation6 + $0x30] sm:$0xff]
          %v821 = vld [vmem:[#allocation6 + $0x38] sm:$0xff]
          %v822 = vld [vmem:[#allocation6 + $0x40] sm:$0xff]
          %v823 = vld [vmem:[#allocation6 + $0x48] sm:$0xff]
          %v824 = vld [vmem:[#allocation6 + $0x50] sm:$0xff]
          %v825 = vld [vmem:[#allocation6 + $0x58] sm:$0xff]
          %v826 = vld [vmem:[#allocation6 + $0x60] sm:$0xff]
          %v827 = vld [vmem:[#allocation6 + $0x68] sm:$0xff]
          %v828 = vld [vmem:[#allocation6 + $0x70] sm:$0xff]
          %v829 = vld [vmem:[#allocation6 + $0x78] sm:$0xff]
          %v830 = vld [vmem:[#allocation6 + $0x80] sm:$0xff]
          %v831 = vld [vmem:[#allocation6 + $0x88] sm:$0xff]
          %v832 = vld [vmem:[#allocation6 + $0x90] sm:$0xff]
          %v833 = vld [vmem:[#allocation6 + $0x98] sm:$0xff]
          %v834 = vld [vmem:[#allocation6 + $0xa0] sm:$0xff]
          %v835 = vld [vmem:[#allocation6 + $0xa8] sm:$0xff]
          %v836 = vld [vmem:[#allocation6 + $0xb0] sm:$0xff]
          %v837 = vld [vmem:[#allocation6 + $0xb8] sm:$0xff]
          %v838 = vld [vmem:[#allocation6 + $0xc0] sm:$0xff]
          %v839 = vld [vmem:[#allocation6 + $0xc8] sm:$0xff]
          %v840 = vld [vmem:[#allocation6 + $0xd0] sm:$0xff]
          %v841 = vld [vmem:[#allocation6 + $0xd8] sm:$0xff]
          %v842 = vld [vmem:[#allocation6 + $0xe0] sm:$0xff]
          %v843 = vld [vmem:[#allocation6 + $0xe8] sm:$0xff]
          %v844 = vld [vmem:[#allocation6 + $0xf0] sm:$0xff]
          %v845 = vld [vmem:[#allocation6 + $0xf8] sm:$0xff]
          %v846 = vld [vmem:[#allocation6 + $0x100] sm:$0xff]
          %v847 = vld [vmem:[#allocation6 + $0x108] sm:$0xff]
          %v848 = vld [vmem:[#allocation6 + $0x110] sm:$0xff]
          %v849 = vld [vmem:[#allocation6 + $0x118] sm:$0xff]
          %v850 = vld [vmem:[#allocation6 + $0x120] sm:$0xff]
          %v851 = vld [vmem:[#allocation6 + $0x128] sm:$0xff]
          %v852 = vld [vmem:[#allocation6 + $0x130] sm:$0xff]
          %v853 = vld [vmem:[#allocation6 + $0x138] sm:$0xff]
          %v854 = vld [vmem:[#allocation6 + $0x140] sm:$0xff]
          %v855 = vld [vmem:[#allocation6 + $0x148] sm:$0xff]
          %v856 = vld [vmem:[#allocation6 + $0x150] sm:$0xff]
          %v857 = vld [vmem:[#allocation6 + $0x158] sm:$0xff]
          %v858 = vld [vmem:[#allocation6 + $0x160] sm:$0xff]
          %v859 = vld [vmem:[#allocation6 + $0x168] sm:$0xff]
          %v860 = vld [vmem:[#allocation6 + $0x170] sm:$0xff]
          %v861 = vld [vmem:[#allocation6 + $0x178] sm:$0xff]
          %v862 = vld [vmem:[#allocation6 + $0x180] sm:$0xff]
          %v863 = vld [vmem:[#allocation6 + $0x188] sm:$0xff]
          %v864 = vld [vmem:[#allocation6 + $0x190] sm:$0xff]
          %v865 = vld [vmem:[#allocation6 + $0x198] sm:$0xff]
          %v866 = vld [vmem:[#allocation6 + $0x1a0] sm:$0xff]
          %v867 = vld [vmem:[#allocation6 + $0x1a8] sm:$0xff]
          %v868 = vld [vmem:[#allocation6 + $0x1b0] sm:$0xff]
          %v869 = vld [vmem:[#allocation6 + $0x1b8] sm:$0xff]
          %v870 = vld [vmem:[#allocation6 + $0x1c0] sm:$0xff]
          %v871 = vld [vmem:[#allocation6 + $0x1c8] sm:$0xff]
          %v872 = vld [vmem:[#allocation6 + $0x1d0] sm:$0xff]
          %v873 = vld [vmem:[#allocation6 + $0x1d8] sm:$0xff]
          %v874 = vld [vmem:[#allocation6 + $0x1e0] sm:$0xff]
          %v875 = vld [vmem:[#allocation6 + $0x1e8] sm:$0xff]
          %v876 = vld [vmem:[#allocation6 + $0x1f0] sm:$0xff]
          %v877 = vld [vmem:[#allocation6 + $0x1f8] sm:$0xff]
          %v878 = vld [vmem:[#allocation6 + $0x200] sm:$0xff]
          %v879 = vld [vmem:[#allocation6 + $0x208] sm:$0xff]
          %v880 = vld [vmem:[#allocation6 + $0x210] sm:$0xff]
          %v881 = vld [vmem:[#allocation6 + $0x218] sm:$0xff]
          %v882 = vld [vmem:[#allocation6 + $0x220] sm:$0xff]
          %v883 = vld [vmem:[#allocation6 + $0x228] sm:$0xff]
          %v884 = vld [vmem:[#allocation6 + $0x230] sm:$0xff]
          %v885 = vld [vmem:[#allocation6 + $0x238] sm:$0xff]
          %v886 = vld [vmem:[#allocation6 + $0x240] sm:$0xff]
          %v887 = vld [vmem:[#allocation6 + $0x248] sm:$0xff]
          %v888 = vld [vmem:[#allocation6 + $0x250] sm:$0xff]
          %v889 = vld [vmem:[#allocation6 + $0x258] sm:$0xff]
          %v890 = vld [vmem:[#allocation6 + $0x260] sm:$0xff]
          %v891 = vld [vmem:[#allocation6 + $0x268] sm:$0xff]
          %v892 = vld [vmem:[#allocation6 + $0x270] sm:$0xff]
          %v893 = vld [vmem:[#allocation6 + $0x278] sm:$0xff]
          %v894 = vld [vmem:[#allocation6 + $0x280] sm:$0xff]
          %v895 = vld [vmem:[#allocation6 + $0x288] sm:$0xff]
          %v896 = vld [vmem:[#allocation6 + $0x290] sm:$0xff]
          %v897 = vld [vmem:[#allocation6 + $0x298] sm:$0xff]
          %v898 = vld [vmem:[#allocation6 + $0x2a0] sm:$0xff]
          %v899 = vld [vmem:[#allocation6 + $0x2a8] sm:$0xff]
          %v900 = vld [vmem:[#allocation6 + $0x2b0] sm:$0xff]
          %v901 = vld [vmem:[#allocation6 + $0x2b8] sm:$0xff]
          %v902 = vld [vmem:[#allocation6 + $0x2c0] sm:$0xff]
          %v903 = vld [vmem:[#allocation6 + $0x2c8] sm:$0xff]
          %v904 = vld [vmem:[#allocation6 + $0x2d0] sm:$0xff]
          %v905 = vld [vmem:[#allocation6 + $0x2d8] sm:$0xff]
          %v906 = vld [vmem:[#allocation6 + $0x2e0] sm:$0xff]
          %v907 = vld [vmem:[#allocation6 + $0x2e8] sm:$0xff]
          %v908 = vld [vmem:[#allocation6 + $0x2f0] sm:$0xff]
          %v909 = vld [vmem:[#allocation6 + $0x2f8] sm:$0xff]
          %v910 = vld [vmem:[#allocation6 + $0x300] sm:$0xff]
          %v911 = vld [vmem:[#allocation6 + $0x308] sm:$0xff]
          %v912 = vld [vmem:[#allocation6 + $0x310] sm:$0xff]
          %v913 = vld [vmem:[#allocation6 + $0x318] sm:$0xff]
          %v914 = vld [vmem:[#allocation6 + $0x320] sm:$0xff]
          %v915 = vld [vmem:[#allocation6 + $0x328] sm:$0xff]
          %v916 = vld [vmem:[#allocation6 + $0x330] sm:$0xff]
          %v917 = vld [vmem:[#allocation6 + $0x338] sm:$0xff]
          %v918 = vld [vmem:[#allocation6 + $0x340] sm:$0xff]
          %v919 = vld [vmem:[#allocation6 + $0x348] sm:$0xff]
          %v920 = vld [vmem:[#allocation6 + $0x350] sm:$0xff]
          %v921 = vld [vmem:[#allocation6 + $0x358] sm:$0xff]
          %v922 = vld [vmem:[#allocation6 + $0x360] sm:$0xff]
          %v923 = vld [vmem:[#allocation6 + $0x368] sm:$0xff]
          %v924 = vld [vmem:[#allocation6 + $0x370] sm:$0xff]
          %v925 = vld [vmem:[#allocation6 + $0x378] sm:$0xff]
          %v926 = vld [vmem:[#allocation6 + $0x380] sm:$0xff]
          %v927 = vld [vmem:[#allocation6 + $0x388] sm:$0xff]
          %v928 = vld [vmem:[#allocation6 + $0x390] sm:$0xff]
          %v929 = vld [vmem:[#allocation6 + $0x398] sm:$0xff]
          %v930 = vld [vmem:[#allocation6 + $0x3a0] sm:$0xff]
          %v931 = vld [vmem:[#allocation6 + $0x3a8] sm:$0xff]
          %v932 = vld [vmem:[#allocation6 + $0x3b0] sm:$0xff]
          %v933 = vld [vmem:[#allocation6 + $0x3b8] sm:$0xff]
          %v934 = vld [vmem:[#allocation6 + $0x3c0] sm:$0xff]
          %v935 = vld [vmem:[#allocation6 + $0x3c8] sm:$0xff]
          %v936 = vld [vmem:[#allocation6 + $0x3d0] sm:$0xff]
          %v937 = vld [vmem:[#allocation6 + $0x3d8] sm:$0xff]
          %v938 = vld [vmem:[#allocation6 + $0x3e0] sm:$0xff]
          %v939 = vld [vmem:[#allocation6 + $0x3e8] sm:$0xff]
          %v940 = vld [vmem:[#allocation6 + $0x3f0] sm:$0xff]
          %v941 = vld [vmem:[#allocation6 + $0x3f8] sm:$0xff]
          %v942 = vld [vmem:[#allocation6 + $0x400] sm:$0xff]
          %v943 = vld [vmem:[#allocation6 + $0x408] sm:$0xff]
          %v944 = vld [vmem:[#allocation6 + $0x410] sm:$0xff]
          %v945 = vld [vmem:[#allocation6 + $0x418] sm:$0xff]
          %v946 = vld [vmem:[#allocation6 + $0x420] sm:$0xff]
          %v947 = vld [vmem:[#allocation6 + $0x428] sm:$0xff]
          %v948 = vld [vmem:[#allocation6 + $0x430] sm:$0xff]
          %v949 = vld [vmem:[#allocation6 + $0x438] sm:$0xff]
          %v950 = vld [vmem:[#allocation6 + $0x440] sm:$0xff]
          %v951 = vld [vmem:[#allocation6 + $0x448] sm:$0xff]
          %v952 = vld [vmem:[#allocation6 + $0x450] sm:$0xff]
          %v953 = vld [vmem:[#allocation6 + $0x458] sm:$0xff]
          %v954 = vld [vmem:[#allocation6 + $0x460] sm:$0xff]
          %v955 = vld [vmem:[#allocation6 + $0x468] sm:$0xff]
          %v956 = vld [vmem:[#allocation6 + $0x470] sm:$0xff]
          %v957 = vld [vmem:[#allocation6 + $0x478] sm:$0xff]
          %v958 = vld [vmem:[#allocation6 + $0x480] sm:$0xff]
          %v959 = vld [vmem:[#allocation6 + $0x488] sm:$0xff]
          %v960 = vld [vmem:[#allocation6 + $0x490] sm:$0xff]
          %v961 = vld [vmem:[#allocation6 + $0x498] sm:$0xff]
          %v962 = vld [vmem:[#allocation6 + $0x4a0] sm:$0xff]
          %v963 = vld [vmem:[#allocation6 + $0x4a8] sm:$0xff]
          %v964 = vld [vmem:[#allocation6 + $0x4b0] sm:$0xff]
          %v965 = vld [vmem:[#allocation6 + $0x4b8] sm:$0xff]
          %v966 = vld [vmem:[#allocation6 + $0x4c0] sm:$0xff]
          %v967 = vld [vmem:[#allocation6 + $0x4c8] sm:$0xff]
          %v968 = vld [vmem:[#allocation6 + $0x4d0] sm:$0xff]
          %v969 = vld [vmem:[#allocation6 + $0x4d8] sm:$0xff]
          %v970 = vld [vmem:[#allocation6 + $0x4e0] sm:$0xff]
          %v971 = vld [vmem:[#allocation6 + $0x4e8] sm:$0xff]
          %v972 = vld [vmem:[#allocation6 + $0x4f0] sm:$0xff]
          %v973 = vld [vmem:[#allocation6 + $0x4f8] sm:$0xff]
          %v974 = vld [vmem:[#allocation6 + $0x500] sm:$0xff]
          %v975 = vld [vmem:[#allocation6 + $0x508] sm:$0xff]
          %v976 = vld [vmem:[#allocation6 + $0x510] sm:$0xff]
          %v977 = vld [vmem:[#allocation6 + $0x518] sm:$0xff]
          %v978 = vld [vmem:[#allocation6 + $0x520] sm:$0xff]
          %v979 = vld [vmem:[#allocation6 + $0x528] sm:$0xff]
          %v980 = vld [vmem:[#allocation6 + $0x530] sm:$0xff]
          %v981 = vld [vmem:[#allocation6 + $0x538] sm:$0xff]
          %v982 = vld [vmem:[#allocation6 + $0x540] sm:$0xff]
          %v983 = vld [vmem:[#allocation6 + $0x548] sm:$0xff]
          %v984 = vld [vmem:[#allocation6 + $0x550] sm:$0xff]
          %v985 = vld [vmem:[#allocation6 + $0x558] sm:$0xff]
          %v986 = vld [vmem:[#allocation6 + $0x560] sm:$0xff]
          %v987 = vld [vmem:[#allocation6 + $0x568] sm:$0xff]
          %v988 = vld [vmem:[#allocation6 + $0x570] sm:$0xff]
          %v989 = vld [vmem:[#allocation6 + $0x578] sm:$0xff]
          %v990 = vld [vmem:[#allocation6 + $0x580] sm:$0xff]
          %v991 = vld [vmem:[#allocation6 + $0x588] sm:$0xff]
          %v992 = vld [vmem:[#allocation6 + $0x590] sm:$0xff]
          %v993 = vld [vmem:[#allocation6 + $0x598] sm:$0xff]
          %v994 = vld [vmem:[#allocation6 + $0x5a0] sm:$0xff]
          %v995 = vld [vmem:[#allocation6 + $0x5a8] sm:$0xff]
          %v996 = vld [vmem:[#allocation6 + $0x5b0] sm:$0xff]
          %v997 = vld [vmem:[#allocation6 + $0x5b8] sm:$0xff]
          %v998 = vld [vmem:[#allocation6 + $0x5c0] sm:$0xff]
          %v999 = vld [vmem:[#allocation6 + $0x5c8] sm:$0xff]
          %v1000 = vld [vmem:[#allocation6 + $0x5d0] sm:$0xff]
          %v1001 = vld [vmem:[#allocation6 + $0x5d8] sm:$0xff]
          %v1002 = vld [vmem:[#allocation6 + $0x5e0] sm:$0xff]
          %v1003 = vld [vmem:[#allocation6 + $0x5e8] sm:$0xff]
          %v1004 = vld [vmem:[#allocation6 + $0x5f0] sm:$0xff]
          %v1005 = vld [vmem:[#allocation6 + $0x5f8] sm:$0xff]
          %v1006 = vld [vmem:[#allocation6 + $0x600] sm:$0xff]
          %v1007 = vld [vmem:[#allocation6 + $0x608] sm:$0xff]
          %v1008 = vld [vmem:[#allocation6 + $0x610] sm:$0xff]
          %v1009 = vld [vmem:[#allocation6 + $0x618] sm:$0xff]
          %v1010 = vld [vmem:[#allocation6 + $0x620] sm:$0xff]
          %v1011 = vld [vmem:[#allocation6 + $0x628] sm:$0xff]
          %v1012 = vld [vmem:[#allocation6 + $0x630] sm:$0xff]
          %v1013 = vld [vmem:[#allocation6 + $0x638] sm:$0xff]
          %v1014 = vld [vmem:[#allocation6 + $0x640] sm:$0xff]
          %v1015 = vld [vmem:[#allocation6 + $0x648] sm:$0xff]
          %v1016 = vld [vmem:[#allocation6 + $0x650] sm:$0xff]
          %v1017 = vld [vmem:[#allocation6 + $0x658] sm:$0xff]
          %v1018 = vld [vmem:[#allocation6 + $0x660] sm:$0xff]
          %v1019 = vld [vmem:[#allocation6 + $0x668] sm:$0xff]
          %v1020 = vld [vmem:[#allocation6 + $0x670] sm:$0xff]
          %v1021 = vld [vmem:[#allocation6 + $0x678] sm:$0xff]
          %v1022 = vld [vmem:[#allocation6 + $0x680] sm:$0xff]
          %v1023 = vld [vmem:[#allocation6 + $0x688] sm:$0xff]
          %v1024 = vld [vmem:[#allocation6 + $0x690] sm:$0xff]
          %v1025 = vld [vmem:[#allocation6 + $0x698] sm:$0xff]
          %v1026 = vld [vmem:[#allocation6 + $0x6a0] sm:$0xff]
          %v1027 = vld [vmem:[#allocation6 + $0x6a8] sm:$0xff]
          %v1028 = vld [vmem:[#allocation6 + $0x6b0] sm:$0xff]
          %v1029 = vld [vmem:[#allocation6 + $0x6b8] sm:$0xff]
          %v1030 = vld [vmem:[#allocation6 + $0x6c0] sm:$0xff]
          %v1031 = vld [vmem:[#allocation6 + $0x6c8] sm:$0xff]
          %v1032 = vld [vmem:[#allocation6 + $0x6d0] sm:$0xff]
          %v1033 = vld [vmem:[#allocation6 + $0x6d8] sm:$0xff]
          %v1034 = vld [vmem:[#allocation6 + $0x6e0] sm:$0xff]
          %v1035 = vld [vmem:[#allocation6 + $0x6e8] sm:$0xff]
          %v1036 = vld [vmem:[#allocation6 + $0x6f0] sm:$0xff]
          %v1037 = vld [vmem:[#allocation6 + $0x6f8] sm:$0xff]
          %v1038 = vld [vmem:[#allocation6 + $0x700] sm:$0xff]
          %v1039 = vld [vmem:[#allocation6 + $0x708] sm:$0xff]
          %v1040 = vld [vmem:[#allocation6 + $0x710] sm:$0xff]
          %v1041 = vld [vmem:[#allocation6 + $0x718] sm:$0xff]
          %v1042 = vld [vmem:[#allocation6 + $0x720] sm:$0xff]
          %v1043 = vld [vmem:[#allocation6 + $0x728] sm:$0xff]
          %v1044 = vld [vmem:[#allocation6 + $0x730] sm:$0xff]
          %v1045 = vld [vmem:[#allocation6 + $0x738] sm:$0xff]
          %v1046 = vld [vmem:[#allocation6 + $0x740] sm:$0xff]
          %v1047 = vld [vmem:[#allocation6 + $0x748] sm:$0xff]
          %v1048 = vld [vmem:[#allocation6 + $0x750] sm:$0xff]
          %v1049 = vld [vmem:[#allocation6 + $0x758] sm:$0xff]
          %v1050 = vld [vmem:[#allocation6 + $0x760] sm:$0xff]
          %v1051 = vld [vmem:[#allocation6 + $0x768] sm:$0xff]
          %v1052 = vld [vmem:[#allocation6 + $0x770] sm:$0xff]
          %v1053 = vld [vmem:[#allocation6 + $0x778] sm:$0xff]
          %v1054 = vld [vmem:[#allocation6 + $0x780] sm:$0xff]
          %v1055 = vld [vmem:[#allocation6 + $0x788] sm:$0xff]
          %v1056 = vld [vmem:[#allocation6 + $0x790] sm:$0xff]
          %v1057 = vld [vmem:[#allocation6 + $0x798] sm:$0xff]
          %v1058 = vld [vmem:[#allocation6 + $0x7a0] sm:$0xff]
          %v1059 = vld [vmem:[#allocation6 + $0x7a8] sm:$0xff]
          %v1060 = vld [vmem:[#allocation6 + $0x7b0] sm:$0xff]
          %v1061 = vld [vmem:[#allocation6 + $0x7b8] sm:$0xff]
          %v1062 = vld [vmem:[#allocation6 + $0x7c0] sm:$0xff]
          %v1063 = vld [vmem:[#allocation6 + $0x7c8] sm:$0xff]
          %v1064 = vld [vmem:[#allocation6 + $0x7d0] sm:$0xff]
          %v1065 = vld [vmem:[#allocation6 + $0x7d8] sm:$0xff]
          %v1066 = vld [vmem:[#allocation6 + $0x7e0] sm:$0xff]
          %v1067 = vld [vmem:[#allocation6 + $0x7e8] sm:$0xff]
          %v1068 = vld [vmem:[#allocation6 + $0x7f0] sm:$0xff]
          %v1069 = vld [vmem:[#allocation6 + $0x7f8] sm:$0xff]
          %v1070 = vld [vmem:[%s2] sm:$0x1]
          %v1072 = vlaneseq
          %v1073 = vshrl.u32 %v1072, 7
          %v1074 = vsub.s32 0, %v1073
          %v1075 = vrot.slane %v1070, %v1074
          %v1081 = vcombine.high %v810, %v810
          %v1083 = vunpack.c.l.s4 1983009808
          %v1084 = vunpack.c.0.s8 %v1083
          %v1085 = vlaneseq
          %v1086 = vshrl.u32 %v1085, 7
          %v1087 = vsub.s32 %v1084, %v1086
          %v1088 = vrot.slane %v810, %v1087
          %v1090 = vunpack.c.l.s4 1983009808
          %v1091 = vunpack.c.0.s8 %v1090
          %v1092 = vlaneseq
          %v1093 = vshrl.u32 %v1092, 7
          %v1094 = vsub.s32 %v1091, %v1093
          %v1095 = vrot.slane %v1081, %v1094
          %v1096 = vcombine.high %v1088, %v1088
          %v1097 = vcombine.high %v1095, %v1095
          %v1098 = vcombine.high %v811, %v811
          %v1100 = vunpack.c.l.s4 1983009808
          %v1101 = vunpack.c.0.s8 %v1100
          %v1102 = vlaneseq
          %v1103 = vshrl.u32 %v1102, 7
          %v1104 = vsub.s32 %v1101, %v1103
          %v1105 = vrot.slane %v811, %v1104
          %v1107 = vunpack.c.l.s4 1983009808
          %v1108 = vunpack.c.0.s8 %v1107
          %v1109 = vlaneseq
          %v1110 = vshrl.u32 %v1109, 7
          %v1111 = vsub.s32 %v1108, %v1110
          %v1112 = vrot.slane %v1098, %v1111
          %v1113 = vcombine.high %v1105, %v1105
          %v1114 = vcombine.high %v1112, %v1112
          %v1115 = vcombine.high %v812, %v812
          %v1117 = vunpack.c.l.s4 1983009808
          %v1118 = vunpack.c.0.s8 %v1117
          %v1119 = vlaneseq
          %v1120 = vshrl.u32 %v1119, 7
          %v1121 = vsub.s32 %v1118, %v1120
          %v1122 = vrot.slane %v812, %v1121
          %v1124 = vunpack.c.l.s4 1983009808
          %v1125 = vunpack.c.0.s8 %v1124
          %v1126 = vlaneseq
          %v1127 = vshrl.u32 %v1126, 7
          %v1128 = vsub.s32 %v1125, %v1127
          %v1129 = vrot.slane %v1115, %v1128
          %v1130 = vcombine.high %v1122, %v1122
          %v1131 = vcombine.high %v1129, %v1129
          %v1132 = vcombine.high %v813, %v813
          %v1134 = vunpack.c.l.s4 1983009808
          %v1135 = vunpack.c.0.s8 %v1134
          %v1136 = vlaneseq
          %v1137 = vshrl.u32 %v1136, 7
          %v1138 = vsub.s32 %v1135, %v1137
          %v1139 = vrot.slane %v813, %v1138
          %v1141 = vunpack.c.l.s4 1983009808
          %v1142 = vunpack.c.0.s8 %v1141
          %v1143 = vlaneseq
          %v1144 = vshrl.u32 %v1143, 7
          %v1145 = vsub.s32 %v1142, %v1144
          %v1146 = vrot.slane %v1132, %v1145
          %v1147 = vcombine.high %v1139, %v1139
          %v1148 = vcombine.high %v1146, %v1146
          %1165 = vmatprep.subr.mxu0 0.0
          %1166 = vmatpush1.msra.mxu0 %v829
          %1167 = vmatprep.subr.mxu0 0.0
          %1168 = vmatpush1.msra.mxu0 %v828
          %1169 = vmatprep.subr.mxu0 0.0
          %1170 = vmatpush1.msra.mxu0 %v827
          %1171 = vmatprep.subr.mxu0 0.0
          %1172 = vmatpush1.msra.mxu0 %v826
          %1173 = vmatprep.subr.mxu0 0.0
          %1174 = vmatpush1.msra.mxu0 %v825
          %1175 = vmatprep.subr.mxu0 0.0
          %1176 = vmatpush1.msra.mxu0 %v824
          %1177 = vmatprep.subr.mxu0 0.0
          %1178 = vmatpush1.msra.mxu0 %v823
          %1179 = vmatprep.subr.mxu0 0.0
          %1180 = vmatpush1.msra.mxu0 %v822
          %1181 = vmatprep.subr.mxu0 0.0
          %1182 = vmatpush1.msra.mxu0 %v821
          %1183 = vmatprep.subr.mxu0 0.0
          %1184 = vmatpush1.msra.mxu0 %v820
          %1185 = vmatprep.subr.mxu0 0.0
          %1186 = vmatpush1.msra.mxu0 %v819
          %1187 = vmatprep.subr.mxu0 0.0
          %1188 = vmatpush1.msra.mxu0 %v818
          %1189 = vmatprep.subr.mxu0 0.0
          %1190 = vmatpush1.msra.mxu0 %v817
          %1191 = vmatprep.subr.mxu0 0.0
          %1192 = vmatpush1.msra.mxu0 %v816
          %1193 = vmatprep.subr.mxu0 0.0
          %1194 = vmatpush1.msra.mxu0 %v815
          %1195 = vmatprep.subr.mxu0 0.0
          %1196 = vmatpush1.msra.mxu0 %v814
          %1197 = vmatprep.subr.mxu0 0.0
          %1198 = vmatpush2.msra.mxu0 %v845
          %1199 = vmatprep.subr.mxu0 0.0
          %1200 = vmatpush2.msra.mxu0 %v844
          %1201 = vmatprep.subr.mxu0 0.0
          %1202 = vmatpush2.msra.mxu0 %v843
          %1203 = vmatprep.subr.mxu0 0.0
          %1204 = vmatpush2.msra.mxu0 %v842
          %1205 = vmatprep.subr.mxu0 0.0
          %1206 = vmatpush2.msra.mxu0 %v841
          %1207 = vmatprep.subr.mxu0 0.0
          %1208 = vmatpush2.msra.mxu0 %v840
          %1209 = vmatprep.subr.mxu0 0.0
          %1210 = vmatpush2.msra.mxu0 %v839
          %1211 = vmatprep.subr.mxu0 0.0
          %1212 = vmatpush2.msra.mxu0 %v838
          %1213 = vmatprep.subr.mxu0 0.0
          %1214 = vmatpush2.msra.mxu0 %v837
          %1215 = vmatprep.subr.mxu0 0.0
          %1216 = vmatpush2.msra.mxu0 %v836
          %1217 = vmatprep.subr.mxu0 0.0
          %1218 = vmatpush2.msra.mxu0 %v835
          %1219 = vmatprep.subr.mxu0 0.0
          %1220 = vmatpush2.msra.mxu0 %v834
          %1221 = vmatprep.subr.mxu0 0.0
          %1222 = vmatpush2.msra.mxu0 %v833
          %1223 = vmatprep.subr.mxu0 0.0
          %1224 = vmatpush2.msra.mxu0 %v832
          %1225 = vmatprep.subr.mxu0 0.0
          %1226 = vmatpush2.msra.mxu0 %v831
          %1227 = vmatprep.subr.mxu0 0.0
          %1228 = vmatpush2.msra.mxu0 %v830
          %1229 = vmatprep.mubr.f32.mxu0 %v1096
          %1230 = vmatmul.mubr.f32.gmra.mxu0 %v1088
          %v1231 = vpop.f32.mrf.mxu0
          %v1232 = vadd.f32 %v1075, %v1231
          %v1233 = vpop.f32.mrf.mxu0
          %1234 = vdwg.mxu0
          %1235 = vmatprep.subr.mxu0 0.0
          %1236 = vmatpush1.msra.mxu0 %v861
          %1237 = vmatprep.subr.mxu0 0.0
          %1238 = vmatpush1.msra.mxu0 %v860
          %1239 = vmatprep.subr.mxu0 0.0
          %1240 = vmatpush1.msra.mxu0 %v859
          %1241 = vmatprep.subr.mxu0 0.0
          %1242 = vmatpush1.msra.mxu0 %v858
          %1243 = vmatprep.subr.mxu0 0.0
          %1244 = vmatpush1.msra.mxu0 %v857
          %1245 = vmatprep.subr.mxu0 0.0
          %1246 = vmatpush1.msra.mxu0 %v856
          %1247 = vmatprep.subr.mxu0 0.0
          %1248 = vmatpush1.msra.mxu0 %v855
          %1249 = vmatprep.subr.mxu0 0.0
          %1250 = vmatpush1.msra.mxu0 %v854
          %1251 = vmatprep.subr.mxu0 0.0
          %1252 = vmatpush1.msra.mxu0 %v853
          %1253 = vmatprep.subr.mxu0 0.0
          %1254 = vmatpush1.msra.mxu0 %v852
          %1255 = vmatprep.subr.mxu0 0.0
          %1256 = vmatpush1.msra.mxu0 %v851
          %1257 = vmatprep.subr.mxu0 0.0
          %1258 = vmatpush1.msra.mxu0 %v850
          %1259 = vmatprep.subr.mxu0 0.0
          %1260 = vmatpush1.msra.mxu0 %v849
          %1261 = vmatprep.subr.mxu0 0.0
          %1262 = vmatpush1.msra.mxu0 %v848
          %1263 = vmatprep.subr.mxu0 0.0
          %1264 = vmatpush1.msra.mxu0 %v847
          %1265 = vmatprep.subr.mxu0 0.0
          %1266 = vmatpush1.msra.mxu0 %v846
          %1267 = vmatprep.subr.mxu0 0.0
          %1268 = vmatpush2.msra.mxu0 %v877
          %1269 = vmatprep.subr.mxu0 0.0
          %1270 = vmatpush2.msra.mxu0 %v876
          %1271 = vmatprep.subr.mxu0 0.0
          %1272 = vmatpush2.msra.mxu0 %v875
          %1273 = vmatprep.subr.mxu0 0.0
          %1274 = vmatpush2.msra.mxu0 %v874
          %1275 = vmatprep.subr.mxu0 0.0
          %1276 = vmatpush2.msra.mxu0 %v873
          %1277 = vmatprep.subr.mxu0 0.0
          %1278 = vmatpush2.msra.mxu0 %v872
          %1279 = vmatprep.subr.mxu0 0.0
          %1280 = vmatpush2.msra.mxu0 %v871
          %1281 = vmatprep.subr.mxu0 0.0
          %1282 = vmatpush2.msra.mxu0 %v870
          %1283 = vmatprep.subr.mxu0 0.0
          %1284 = vmatpush2.msra.mxu0 %v869
          %1285 = vmatprep.subr.mxu0 0.0
          %1286 = vmatpush2.msra.mxu0 %v868
          %1287 = vmatprep.subr.mxu0 0.0
          %1288 = vmatpush2.msra.mxu0 %v867
          %1289 = vmatprep.subr.mxu0 0.0
          %1290 = vmatpush2.msra.mxu0 %v866
          %1291 = vmatprep.subr.mxu0 0.0
          %1292 = vmatpush2.msra.mxu0 %v865
          %1293 = vmatprep.subr.mxu0 0.0
          %1294 = vmatpush2.msra.mxu0 %v864
          %1295 = vmatprep.subr.mxu0 0.0
          %1296 = vmatpush2.msra.mxu0 %v863
          %1297 = vmatprep.subr.mxu0 0.0
          %1298 = vmatpush2.msra.mxu0 %v862
          %1299 = vmatprep.mubr.f32.mxu0 %v1097
          %1300 = vmatmul.mubr.f32.gmra.mxu0 %v1095
          %v1301 = vpop.f32.mrf.mxu0
          %v1302 = vadd.f32 %v1232, %v1301
          %v1303 = vpop.f32.mrf.mxu0
          %1304 = vdwg.mxu0
          %1305 = vmatprep.subr.mxu0 0.0
          %1306 = vmatpush1.msra.mxu0 %v893
          %1307 = vmatprep.subr.mxu0 0.0
          %1308 = vmatpush1.msra.mxu0 %v892
          %1309 = vmatprep.subr.mxu0 0.0
          %1310 = vmatpush1.msra.mxu0 %v891
          %1311 = vmatprep.subr.mxu0 0.0
          %1312 = vmatpush1.msra.mxu0 %v890
          %1313 = vmatprep.subr.mxu0 0.0
          %1314 = vmatpush1.msra.mxu0 %v889
          %1315 = vmatprep.subr.mxu0 0.0
          %1316 = vmatpush1.msra.mxu0 %v888
          %1317 = vmatprep.subr.mxu0 0.0
          %1318 = vmatpush1.msra.mxu0 %v887
          %1319 = vmatprep.subr.mxu0 0.0
          %1320 = vmatpush1.msra.mxu0 %v886
          %1321 = vmatprep.subr.mxu0 0.0
          %1322 = vmatpush1.msra.mxu0 %v885
          %1323 = vmatprep.subr.mxu0 0.0
          %1324 = vmatpush1.msra.mxu0 %v884
          %1325 = vmatprep.subr.mxu0 0.0
          %1326 = vmatpush1.msra.mxu0 %v883
          %1327 = vmatprep.subr.mxu0 0.0
          %1328 = vmatpush1.msra.mxu0 %v882
          %1329 = vmatprep.subr.mxu0 0.0
          %1330 = vmatpush1.msra.mxu0 %v881
          %1331 = vmatprep.subr.mxu0 0.0
          %1332 = vmatpush1.msra.mxu0 %v880
          %1333 = vmatprep.subr.mxu0 0.0
          %1334 = vmatpush1.msra.mxu0 %v879
          %1335 = vmatprep.subr.mxu0 0.0
          %1336 = vmatpush1.msra.mxu0 %v878
          %1337 = vmatprep.subr.mxu0 0.0
          %1338 = vmatpush2.msra.mxu0 %v909
          %1339 = vmatprep.subr.mxu0 0.0
          %1340 = vmatpush2.msra.mxu0 %v908
          %1341 = vmatprep.subr.mxu0 0.0
          %1342 = vmatpush2.msra.mxu0 %v907
          %1343 = vmatprep.subr.mxu0 0.0
          %1344 = vmatpush2.msra.mxu0 %v906
          %1345 = vmatprep.subr.mxu0 0.0
          %1346 = vmatpush2.msra.mxu0 %v905
          %1347 = vmatprep.subr.mxu0 0.0
          %1348 = vmatpush2.msra.mxu0 %v904
          %1349 = vmatprep.subr.mxu0 0.0
          %1350 = vmatpush2.msra.mxu0 %v903
          %1351 = vmatprep.subr.mxu0 0.0
          %1352 = vmatpush2.msra.mxu0 %v902
          %1353 = vmatprep.subr.mxu0 0.0
          %1354 = vmatpush2.msra.mxu0 %v901
          %1355 = vmatprep.subr.mxu0 0.0
          %1356 = vmatpush2.msra.mxu0 %v900
          %1357 = vmatprep.subr.mxu0 0.0
          %1358 = vmatpush2.msra.mxu0 %v899
          %1359 = vmatprep.subr.mxu0 0.0
          %1360 = vmatpush2.msra.mxu0 %v898
          %1361 = vmatprep.subr.mxu0 0.0
          %1362 = vmatpush2.msra.mxu0 %v897
          %1363 = vmatprep.subr.mxu0 0.0
          %1364 = vmatpush2.msra.mxu0 %v896
          %1365 = vmatprep.subr.mxu0 0.0
          %1366 = vmatpush2.msra.mxu0 %v895
          %1367 = vmatprep.subr.mxu0 0.0
          %1368 = vmatpush2.msra.mxu0 %v894
          %1369 = vmatprep.mubr.f32.mxu0 %v1113
          %1370 = vmatmul.mubr.f32.gmra.mxu0 %v1105
          %v1371 = vpop.f32.mrf.mxu0
          %v1372 = vadd.f32 %v1302, %v1371
          %v1373 = vpop.f32.mrf.mxu0
          %1374 = vdwg.mxu0
          %1375 = vmatprep.subr.mxu0 0.0
          %1376 = vmatpush1.msra.mxu0 %v925
          %1377 = vmatprep.subr.mxu0 0.0
          %1378 = vmatpush1.msra.mxu0 %v924
          %1379 = vmatprep.subr.mxu0 0.0
          %1380 = vmatpush1.msra.mxu0 %v923
          %1381 = vmatprep.subr.mxu0 0.0
          %1382 = vmatpush1.msra.mxu0 %v922
          %1383 = vmatprep.subr.mxu0 0.0
          %1384 = vmatpush1.msra.mxu0 %v921
          %1385 = vmatprep.subr.mxu0 0.0
          %1386 = vmatpush1.msra.mxu0 %v920
          %1387 = vmatprep.subr.mxu0 0.0
          %1388 = vmatpush1.msra.mxu0 %v919
          %1389 = vmatprep.subr.mxu0 0.0
          %1390 = vmatpush1.msra.mxu0 %v918
          %1391 = vmatprep.subr.mxu0 0.0
          %1392 = vmatpush1.msra.mxu0 %v917
          %1393 = vmatprep.subr.mxu0 0.0
          %1394 = vmatpush1.msra.mxu0 %v916
          %1395 = vmatprep.subr.mxu0 0.0
          %1396 = vmatpush1.msra.mxu0 %v915
          %1397 = vmatprep.subr.mxu0 0.0
          %1398 = vmatpush1.msra.mxu0 %v914
          %1399 = vmatprep.subr.mxu0 0.0
          %1400 = vmatpush1.msra.mxu0 %v913
          %1401 = vmatprep.subr.mxu0 0.0
          %1402 = vmatpush1.msra.mxu0 %v912
          %1403 = vmatprep.subr.mxu0 0.0
          %1404 = vmatpush1.msra.mxu0 %v911
          %1405 = vmatprep.subr.mxu0 0.0
          %1406 = vmatpush1.msra.mxu0 %v910
          %1407 = vmatprep.subr.mxu0 0.0
          %1408 = vmatpush2.msra.mxu0 %v941
          %1409 = vmatprep.subr.mxu0 0.0
          %1410 = vmatpush2.msra.mxu0 %v940
          %1411 = vmatprep.subr.mxu0 0.0
          %1412 = vmatpush2.msra.mxu0 %v939
          %1413 = vmatprep.subr.mxu0 0.0
          %1414 = vmatpush2.msra.mxu0 %v938
          %1415 = vmatprep.subr.mxu0 0.0
          %1416 = vmatpush2.msra.mxu0 %v937
          %1417 = vmatprep.subr.mxu0 0.0
          %1418 = vmatpush2.msra.mxu0 %v936
          %1419 = vmatprep.subr.mxu0 0.0
          %1420 = vmatpush2.msra.mxu0 %v935
          %1421 = vmatprep.subr.mxu0 0.0
          %1422 = vmatpush2.msra.mxu0 %v934
          %1423 = vmatprep.subr.mxu0 0.0
          %1424 = vmatpush2.msra.mxu0 %v933
          %1425 = vmatprep.subr.mxu0 0.0
          %1426 = vmatpush2.msra.mxu0 %v932
          %1427 = vmatprep.subr.mxu0 0.0
          %1428 = vmatpush2.msra.mxu0 %v931
          %1429 = vmatprep.subr.mxu0 0.0
          %1430 = vmatpush2.msra.mxu0 %v930
          %1431 = vmatprep.subr.mxu0 0.0
          %1432 = vmatpush2.msra.mxu0 %v929
          %1433 = vmatprep.subr.mxu0 0.0
          %1434 = vmatpush2.msra.mxu0 %v928
          %1435 = vmatprep.subr.mxu0 0.0
          %1436 = vmatpush2.msra.mxu0 %v927
          %1437 = vmatprep.subr.mxu0 0.0
          %1438 = vmatpush2.msra.mxu0 %v926
          %1439 = vmatprep.mubr.f32.mxu0 %v1114
          %1440 = vmatmul.mubr.f32.gmra.mxu0 %v1112
          %v1441 = vpop.f32.mrf.mxu0
          %v1442 = vadd.f32 %v1372, %v1441
          %v1443 = vpop.f32.mrf.mxu0
          %1444 = vdwg.mxu0
          %1445 = vmatprep.subr.mxu0 0.0
          %1446 = vmatpush1.msra.mxu0 %v957
          %1447 = vmatprep.subr.mxu0 0.0
          %1448 = vmatpush1.msra.mxu0 %v956
          %1449 = vmatprep.subr.mxu0 0.0
          %1450 = vmatpush1.msra.mxu0 %v955
          %1451 = vmatprep.subr.mxu0 0.0
          %1452 = vmatpush1.msra.mxu0 %v954
          %1453 = vmatprep.subr.mxu0 0.0
          %1454 = vmatpush1.msra.mxu0 %v953
          %1455 = vmatprep.subr.mxu0 0.0
          %1456 = vmatpush1.msra.mxu0 %v952
          %1457 = vmatprep.subr.mxu0 0.0
          %1458 = vmatpush1.msra.mxu0 %v951
          %1459 = vmatprep.subr.mxu0 0.0
          %1460 = vmatpush1.msra.mxu0 %v950
          %1461 = vmatprep.subr.mxu0 0.0
          %1462 = vmatpush1.msra.mxu0 %v949
          %1463 = vmatprep.subr.mxu0 0.0
          %1464 = vmatpush1.msra.mxu0 %v948
          %1465 = vmatprep.subr.mxu0 0.0
          %1466 = vmatpush1.msra.mxu0 %v947
          %1467 = vmatprep.subr.mxu0 0.0
          %1468 = vmatpush1.msra.mxu0 %v946
          %1469 = vmatprep.subr.mxu0 0.0
          %1470 = vmatpush1.msra.mxu0 %v945
          %1471 = vmatprep.subr.mxu0 0.0
          %1472 = vmatpush1.msra.mxu0 %v944
          %1473 = vmatprep.subr.mxu0 0.0
          %1474 = vmatpush1.msra.mxu0 %v943
          %1475 = vmatprep.subr.mxu0 0.0
          %1476 = vmatpush1.msra.mxu0 %v942
          %1477 = vmatprep.subr.mxu0 0.0
          %1478 = vmatpush2.msra.mxu0 %v973
          %1479 = vmatprep.subr.mxu0 0.0
          %1480 = vmatpush2.msra.mxu0 %v972
          %1481 = vmatprep.subr.mxu0 0.0
          %1482 = vmatpush2.msra.mxu0 %v971
          %1483 = vmatprep.subr.mxu0 0.0
          %1484 = vmatpush2.msra.mxu0 %v970
          %1485 = vmatprep.subr.mxu0 0.0
          %1486 = vmatpush2.msra.mxu0 %v969
          %1487 = vmatprep.subr.mxu0 0.0
          %1488 = vmatpush2.msra.mxu0 %v968
          %1489 = vmatprep.subr.mxu0 0.0
          %1490 = vmatpush2.msra.mxu0 %v967
          %1491 = vmatprep.subr.mxu0 0.0
          %1492 = vmatpush2.msra.mxu0 %v966
          %1493 = vmatprep.subr.mxu0 0.0
          %1494 = vmatpush2.msra.mxu0 %v965
          %1495 = vmatprep.subr.mxu0 0.0
          %1496 = vmatpush2.msra.mxu0 %v964
          %1497 = vmatprep.subr.mxu0 0.0
          %1498 = vmatpush2.msra.mxu0 %v963
          %1499 = vmatprep.subr.mxu0 0.0
          %1500 = vmatpush2.msra.mxu0 %v962
          %1501 = vmatprep.subr.mxu0 0.0
          %1502 = vmatpush2.msra.mxu0 %v961
          %1503 = vmatprep.subr.mxu0 0.0
          %1504 = vmatpush2.msra.mxu0 %v960
          %1505 = vmatprep.subr.mxu0 0.0
          %1506 = vmatpush2.msra.mxu0 %v959
          %1507 = vmatprep.subr.mxu0 0.0
          %1508 = vmatpush2.msra.mxu0 %v958
          %1509 = vmatprep.mubr.f32.mxu0 %v1130
          %1510 = vmatmul.mubr.f32.gmra.mxu0 %v1122
          %v1511 = vpop.f32.mrf.mxu0
          %v1512 = vadd.f32 %v1442, %v1511
          %v1513 = vpop.f32.mrf.mxu0
          %1514 = vdwg.mxu0
          %1515 = vmatprep.subr.mxu0 0.0
          %1516 = vmatpush1.msra.mxu0 %v989
          %1517 = vmatprep.subr.mxu0 0.0
          %1518 = vmatpush1.msra.mxu0 %v988
          %1519 = vmatprep.subr.mxu0 0.0
          %1520 = vmatpush1.msra.mxu0 %v987
          %1521 = vmatprep.subr.mxu0 0.0
          %1522 = vmatpush1.msra.mxu0 %v986
          %1523 = vmatprep.subr.mxu0 0.0
          %1524 = vmatpush1.msra.mxu0 %v985
          %1525 = vmatprep.subr.mxu0 0.0
          %1526 = vmatpush1.msra.mxu0 %v984
          %1527 = vmatprep.subr.mxu0 0.0
          %1528 = vmatpush1.msra.mxu0 %v983
          %1529 = vmatprep.subr.mxu0 0.0
          %1530 = vmatpush1.msra.mxu0 %v982
          %1531 = vmatprep.subr.mxu0 0.0
          %1532 = vmatpush1.msra.mxu0 %v981
          %1533 = vmatprep.subr.mxu0 0.0
          %1534 = vmatpush1.msra.mxu0 %v980
          %1535 = vmatprep.subr.mxu0 0.0
          %1536 = vmatpush1.msra.mxu0 %v979
          %1537 = vmatprep.subr.mxu0 0.0
          %1538 = vmatpush1.msra.mxu0 %v978
          %1539 = vmatprep.subr.mxu0 0.0
          %1540 = vmatpush1.msra.mxu0 %v977
          %1541 = vmatprep.subr.mxu0 0.0
          %1542 = vmatpush1.msra.mxu0 %v976
          %1543 = vmatprep.subr.mxu0 0.0
          %1544 = vmatpush1.msra.mxu0 %v975
          %1545 = vmatprep.subr.mxu0 0.0
          %1546 = vmatpush1.msra.mxu0 %v974
          %1547 = vmatprep.subr.mxu0 0.0
          %1548 = vmatpush2.msra.mxu0 %v1005
          %1549 = vmatprep.subr.mxu0 0.0
          %1550 = vmatpush2.msra.mxu0 %v1004
          %1551 = vmatprep.subr.mxu0 0.0
          %1552 = vmatpush2.msra.mxu0 %v1003
          %1553 = vmatprep.subr.mxu0 0.0
          %1554 = vmatpush2.msra.mxu0 %v1002
          %1555 = vmatprep.subr.mxu0 0.0
          %1556 = vmatpush2.msra.mxu0 %v1001
          %1557 = vmatprep.subr.mxu0 0.0
          %1558 = vmatpush2.msra.mxu0 %v1000
          %1559 = vmatprep.subr.mxu0 0.0
          %1560 = vmatpush2.msra.mxu0 %v999
          %1561 = vmatprep.subr.mxu0 0.0
          %1562 = vmatpush2.msra.mxu0 %v998
          %1563 = vmatprep.subr.mxu0 0.0
          %1564 = vmatpush2.msra.mxu0 %v997
          %1565 = vmatprep.subr.mxu0 0.0
          %1566 = vmatpush2.msra.mxu0 %v996
          %1567 = vmatprep.subr.mxu0 0.0
          %1568 = vmatpush2.msra.mxu0 %v995
          %1569 = vmatprep.subr.mxu0 0.0
          %1570 = vmatpush2.msra.mxu0 %v994
          %1571 = vmatprep.subr.mxu0 0.0
          %1572 = vmatpush2.msra.mxu0 %v993
          %1573 = vmatprep.subr.mxu0 0.0
          %1574 = vmatpush2.msra.mxu0 %v992
          %1575 = vmatprep.subr.mxu0 0.0
          %1576 = vmatpush2.msra.mxu0 %v991
          %1577 = vmatprep.subr.mxu0 0.0
          %1578 = vmatpush2.msra.mxu0 %v990
          %1579 = vmatprep.mubr.f32.mxu0 %v1131
          %1580 = vmatmul.mubr.f32.gmra.mxu0 %v1129
          %v1581 = vpop.f32.mrf.mxu0
          %v1582 = vadd.f32 %v1512, %v1581
          %v1583 = vpop.f32.mrf.mxu0
          %1584 = vdwg.mxu0
          %1585 = vmatprep.subr.mxu0 0.0
          %1586 = vmatpush1.msra.mxu0 %v1021
          %1587 = vmatprep.subr.mxu0 0.0
          %1588 = vmatpush1.msra.mxu0 %v1020
          %1589 = vmatprep.subr.mxu0 0.0
          %1590 = vmatpush1.msra.mxu0 %v1019
          %1591 = vmatprep.subr.mxu0 0.0
          %1592 = vmatpush1.msra.mxu0 %v1018
          %1593 = vmatprep.subr.mxu0 0.0
          %1594 = vmatpush1.msra.mxu0 %v1017
          %1595 = vmatprep.subr.mxu0 0.0
          %1596 = vmatpush1.msra.mxu0 %v1016
          %1597 = vmatprep.subr.mxu0 0.0
          %1598 = vmatpush1.msra.mxu0 %v1015
          %1599 = vmatprep.subr.mxu0 0.0
          %1600 = vmatpush1.msra.mxu0 %v1014
          %1601 = vmatprep.subr.mxu0 0.0
          %1602 = vmatpush1.msra.mxu0 %v1013
          %1603 = vmatprep.subr.mxu0 0.0
          %1604 = vmatpush1.msra.mxu0 %v1012
          %1605 = vmatprep.subr.mxu0 0.0
          %1606 = vmatpush1.msra.mxu0 %v1011
          %1607 = vmatprep.subr.mxu0 0.0
          %1608 = vmatpush1.msra.mxu0 %v1010
          %1609 = vmatprep.subr.mxu0 0.0
          %1610 = vmatpush1.msra.mxu0 %v1009
          %1611 = vmatprep.subr.mxu0 0.0
          %1612 = vmatpush1.msra.mxu0 %v1008
          %1613 = vmatprep.subr.mxu0 0.0
          %1614 = vmatpush1.msra.mxu0 %v1007
          %1615 = vmatprep.subr.mxu0 0.0
          %1616 = vmatpush1.msra.mxu0 %v1006
          %1617 = vmatprep.subr.mxu0 0.0
          %1618 = vmatpush2.msra.mxu0 %v1037
          %1619 = vmatprep.subr.mxu0 0.0
          %1620 = vmatpush2.msra.mxu0 %v1036
          %1621 = vmatprep.subr.mxu0 0.0
          %1622 = vmatpush2.msra.mxu0 %v1035
          %1623 = vmatprep.subr.mxu0 0.0
          %1624 = vmatpush2.msra.mxu0 %v1034
          %1625 = vmatprep.subr.mxu0 0.0
          %1626 = vmatpush2.msra.mxu0 %v1033
          %1627 = vmatprep.subr.mxu0 0.0
          %1628 = vmatpush2.msra.mxu0 %v1032
          %1629 = vmatprep.subr.mxu0 0.0
          %1630 = vmatpush2.msra.mxu0 %v1031
          %1631 = vmatprep.subr.mxu0 0.0
          %1632 = vmatpush2.msra.mxu0 %v1030
          %1633 = vmatprep.subr.mxu0 0.0
          %1634 = vmatpush2.msra.mxu0 %v1029
          %1635 = vmatprep.subr.mxu0 0.0
          %1636 = vmatpush2.msra.mxu0 %v1028
          %1637 = vmatprep.subr.mxu0 0.0
          %1638 = vmatpush2.msra.mxu0 %v1027
          %1639 = vmatprep.subr.mxu0 0.0
          %1640 = vmatpush2.msra.mxu0 %v1026
          %1641 = vmatprep.subr.mxu0 0.0
          %1642 = vmatpush2.msra.mxu0 %v1025
          %1643 = vmatprep.subr.mxu0 0.0
          %1644 = vmatpush2.msra.mxu0 %v1024
          %1645 = vmatprep.subr.mxu0 0.0
          %1646 = vmatpush2.msra.mxu0 %v1023
          %1647 = vmatprep.subr.mxu0 0.0
          %1648 = vmatpush2.msra.mxu0 %v1022
          %1649 = vmatprep.mubr.f32.mxu0 %v1147
          %1650 = vmatmul.mubr.f32.gmra.mxu0 %v1139
          %v1651 = vpop.f32.mrf.mxu0
          %v1652 = vadd.f32 %v1582, %v1651
          %v1653 = vpop.f32.mrf.mxu0
          %1654 = vdwg.mxu0
          %1655 = vmatprep.subr.mxu0 0.0
          %1656 = vmatpush1.msra.mxu0 %v1053
          %1657 = vmatprep.subr.mxu0 0.0
          %1658 = vmatpush1.msra.mxu0 %v1052
          %1659 = vmatprep.subr.mxu0 0.0
          %1660 = vmatpush1.msra.mxu0 %v1051
          %1661 = vmatprep.subr.mxu0 0.0
          %1662 = vmatpush1.msra.mxu0 %v1050
          %1663 = vmatprep.subr.mxu0 0.0
          %1664 = vmatpush1.msra.mxu0 %v1049
          %1665 = vmatprep.subr.mxu0 0.0
          %1666 = vmatpush1.msra.mxu0 %v1048
          %1667 = vmatprep.subr.mxu0 0.0
          %1668 = vmatpush1.msra.mxu0 %v1047
          %1669 = vmatprep.subr.mxu0 0.0
          %1670 = vmatpush1.msra.mxu0 %v1046
          %1671 = vmatprep.subr.mxu0 0.0
          %1672 = vmatpush1.msra.mxu0 %v1045
          %1673 = vmatprep.subr.mxu0 0.0
          %1674 = vmatpush1.msra.mxu0 %v1044
          %1675 = vmatprep.subr.mxu0 0.0
          %1676 = vmatpush1.msra.mxu0 %v1043
          %1677 = vmatprep.subr.mxu0 0.0
          %1678 = vmatpush1.msra.mxu0 %v1042
          %1679 = vmatprep.subr.mxu0 0.0
          %1680 = vmatpush1.msra.mxu0 %v1041
          %1681 = vmatprep.subr.mxu0 0.0
          %1682 = vmatpush1.msra.mxu0 %v1040
          %1683 = vmatprep.subr.mxu0 0.0
          %1684 = vmatpush1.msra.mxu0 %v1039
          %1685 = vmatprep.subr.mxu0 0.0
          %1686 = vmatpush1.msra.mxu0 %v1038
          %1687 = vmatprep.subr.mxu0 0.0
          %1688 = vmatpush2.msra.mxu0 %v1069
          %1689 = vmatprep.subr.mxu0 0.0
          %1690 = vmatpush2.msra.mxu0 %v1068
          %1691 = vmatprep.subr.mxu0 0.0
          %1692 = vmatpush2.msra.mxu0 %v1067
          %1693 = vmatprep.subr.mxu0 0.0
          %1694 = vmatpush2.msra.mxu0 %v1066
          %1695 = vmatprep.subr.mxu0 0.0
          %1696 = vmatpush2.msra.mxu0 %v1065
          %1697 = vmatprep.subr.mxu0 0.0
          %1698 = vmatpush2.msra.mxu0 %v1064
          %1699 = vmatprep.subr.mxu0 0.0
          %1700 = vmatpush2.msra.mxu0 %v1063
          %1701 = vmatprep.subr.mxu0 0.0
          %1702 = vmatpush2.msra.mxu0 %v1062
          %1703 = vmatprep.subr.mxu0 0.0
          %1704 = vmatpush2.msra.mxu0 %v1061
          %1705 = vmatprep.subr.mxu0 0.0
          %1706 = vmatpush2.msra.mxu0 %v1060
          %1707 = vmatprep.subr.mxu0 0.0
          %1708 = vmatpush2.msra.mxu0 %v1059
          %1709 = vmatprep.subr.mxu0 0.0
          %1710 = vmatpush2.msra.mxu0 %v1058
          %1711 = vmatprep.subr.mxu0 0.0
          %1712 = vmatpush2.msra.mxu0 %v1057
          %1713 = vmatprep.subr.mxu0 0.0
          %1714 = vmatpush2.msra.mxu0 %v1056
          %1715 = vmatprep.subr.mxu0 0.0
          %1716 = vmatpush2.msra.mxu0 %v1055
          %1717 = vmatprep.subr.mxu0 0.0
          %1718 = vmatpush2.msra.mxu0 %v1054
          %1719 = vmatprep.mubr.f32.mxu0 %v1148
          %1720 = vmatmul.mubr.f32.gmra.mxu0 %v1146
          %v1721 = vpop.f32.mrf.mxu0
          %v1722 = vadd.f32 %v1652, %v1721
          %v1723 = vpop.f32.mrf.mxu0
          %1724 = vdwg.mxu0
          %v1725 = vmax.f32 %v1722, 0.0
          %v1726 = vld [vmem:[#allocation8] sm:$0xff]
          %v1727 = vld [vmem:[#allocation8 + $0x8] sm:$0xff]
          %v1728 = vld [vmem:[#allocation8 + $0x10] sm:$0xff]
          %v1729 = vld [vmem:[#allocation8 + $0x18] sm:$0xff]
          %v1730 = vld [vmem:[#allocation8 + $0x20] sm:$0xff]
          %v1731 = vld [vmem:[#allocation8 + $0x28] sm:$0xff]
          %v1732 = vld [vmem:[#allocation8 + $0x30] sm:$0xff]
          %v1733 = vld [vmem:[#allocation8 + $0x38] sm:$0xff]
          %v1734 = vld [vmem:[#allocation8 + $0x40] sm:$0xff]
          %v1735 = vld [vmem:[#allocation8 + $0x48] sm:$0xff]
          %v1736 = vld [vmem:[#allocation8 + $0x50] sm:$0xff]
          %v1737 = vld [vmem:[#allocation8 + $0x58] sm:$0xff]
          %v1738 = vld [vmem:[#allocation8 + $0x60] sm:$0xff]
          %v1739 = vld [vmem:[#allocation8 + $0x68] sm:$0xff]
          %v1740 = vld [vmem:[#allocation8 + $0x70] sm:$0xff]
          %v1741 = vld [vmem:[#allocation8 + $0x78] sm:$0xff]
          %v1742 = vld [vmem:[%s4] sm:$0x1]
          %v1744 = vlaneseq
          %v1745 = vshrl.u32 %v1744, 7
          %v1746 = vsub.s32 0, %v1745
          %v1747 = vrot.slane %v1742, %v1746
          %1749 = vmatprep.subr.mxu0 0.0
          %1750 = vmatpush1.msra.mxu0 %v1741
          %1751 = vmatprep.subr.mxu0 0.0
          %1752 = vmatpush1.msra.mxu0 %v1740
          %1753 = vmatprep.subr.mxu0 0.0
          %1754 = vmatpush1.msra.mxu0 %v1739
          %1755 = vmatprep.subr.mxu0 0.0
          %1756 = vmatpush1.msra.mxu0 %v1738
          %1757 = vmatprep.subr.mxu0 0.0
          %1758 = vmatpush1.msra.mxu0 %v1737
          %1759 = vmatprep.subr.mxu0 0.0
          %1760 = vmatpush1.msra.mxu0 %v1736
          %1761 = vmatprep.subr.mxu0 0.0
          %1762 = vmatpush1.msra.mxu0 %v1735
          %1763 = vmatprep.subr.mxu0 0.0
          %1764 = vmatpush1.msra.mxu0 %v1734
          %1765 = vmatprep.subr.mxu0 0.0
          %1766 = vmatpush1.msra.mxu0 %v1733
          %1767 = vmatprep.subr.mxu0 0.0
          %1768 = vmatpush1.msra.mxu0 %v1732
          %1769 = vmatprep.subr.mxu0 0.0
          %1770 = vmatpush1.msra.mxu0 %v1731
          %1771 = vmatprep.subr.mxu0 0.0
          %1772 = vmatpush1.msra.mxu0 %v1730
          %1773 = vmatprep.subr.mxu0 0.0
          %1774 = vmatpush1.msra.mxu0 %v1729
          %1775 = vmatprep.subr.mxu0 0.0
          %1776 = vmatpush1.msra.mxu0 %v1728
          %1777 = vmatprep.subr.mxu0 0.0
          %1778 = vmatpush1.msra.mxu0 %v1727
          %1779 = vmatprep.subr.mxu0 0.0
          %1780 = vmatpush1.msra.mxu0 %v1726
          %1781 = vmatprep.subr.mxu0 0.0
          %1782 = vmatpush2.msra.mxu0 0.0
          %1783 = vmatprep.subr.mxu0 0.0
          %1784 = vmatpush2.msra.mxu0 0.0
          %1785 = vmatprep.subr.mxu0 0.0
          %1786 = vmatpush2.msra.mxu0 0.0
          %1787 = vmatprep.subr.mxu0 0.0
          %1788 = vmatpush2.msra.mxu0 0.0
          %1789 = vmatprep.subr.mxu0 0.0
          %1790 = vmatpush2.msra.mxu0 0.0
          %1791 = vmatprep.subr.mxu0 0.0
          %1792 = vmatpush2.msra.mxu0 0.0
          %1793 = vmatprep.subr.mxu0 0.0
          %1794 = vmatpush2.msra.mxu0 0.0
          %1795 = vmatprep.subr.mxu0 0.0
          %1796 = vmatpush2.msra.mxu0 0.0
          %1797 = vmatprep.subr.mxu0 0.0
          %1798 = vmatpush2.msra.mxu0 0.0
          %1799 = vmatprep.subr.mxu0 0.0
          %1800 = vmatpush2.msra.mxu0 0.0
          %1801 = vmatprep.subr.mxu0 0.0
          %1802 = vmatpush2.msra.mxu0 0.0
          %1803 = vmatprep.subr.mxu0 0.0
          %1804 = vmatpush2.msra.mxu0 0.0
          %1805 = vmatprep.subr.mxu0 0.0
          %1806 = vmatpush2.msra.mxu0 0.0
          %1807 = vmatprep.subr.mxu0 0.0
          %1808 = vmatpush2.msra.mxu0 0.0
          %1809 = vmatprep.subr.mxu0 0.0
          %1810 = vmatpush2.msra.mxu0 0.0
          %1811 = vmatprep.subr.mxu0 0.0
          %1812 = vmatpush2.msra.mxu0 0.0
          %1813 = vmatprep.mubr.f32.mxu0 0.0
          %1814 = vmatmul.mubr.f32.gmra.mxu0 %v1725
          %v1815 = vpop.f32.mrf.mxu0
          %v1816 = vadd.f32 %v1747, %v1815
          %v1817 = vpop.f32.mrf.mxu0
          %1818 = vdwg.mxu0
          %v1819 = vmax.f32 %v1816, 0.0
          %v1820 = vld [vmem:[#allocation9] sm:$0xff]
          %v1821 = vld [vmem:[#allocation9 + $0x8] sm:$0xff]
          %v1822 = vld [vmem:[#allocation9 + $0x10] sm:$0xff]
          %v1823 = vld [vmem:[#allocation9 + $0x18] sm:$0xff]
          %v1824 = vld [vmem:[#allocation9 + $0x20] sm:$0xff]
          %v1825 = vld [vmem:[#allocation9 + $0x28] sm:$0xff]
          %v1826 = vld [vmem:[#allocation9 + $0x30] sm:$0xff]
          %v1827 = vld [vmem:[#allocation9 + $0x38] sm:$0xff]
          %v1828 = vld [vmem:[#allocation9 + $0x40] sm:$0xff]
          %v1829 = vld [vmem:[#allocation9 + $0x48] sm:$0xff]
          %v1830 = vld [vmem:[#allocation9 + $0x50] sm:$0xff]
          %v1831 = vld [vmem:[#allocation9 + $0x58] sm:$0xff]
          %v1832 = vld [vmem:[#allocation9 + $0x60] sm:$0xff]
          %v1833 = vld [vmem:[#allocation9 + $0x68] sm:$0xff]
          %v1834 = vld [vmem:[#allocation9 + $0x70] sm:$0xff]
          %v1835 = vld [vmem:[#allocation9 + $0x78] sm:$0xff]
          %v1836 = vld [vmem:[%s6] sm:$0x1]
          %v1838 = vlaneseq
          %v1839 = vshrl.u32 %v1838, 7
          %v1840 = vsub.s32 0, %v1839
          %v1841 = vrot.slane %v1836, %v1840
          %1843 = vmatprep.subr.mxu0 0.0
          %1844 = vmatpush1.msra.mxu0 %v1835
          %1845 = vmatprep.subr.mxu0 0.0
          %1846 = vmatpush1.msra.mxu0 %v1834
          %1847 = vmatprep.subr.mxu0 0.0
          %1848 = vmatpush1.msra.mxu0 %v1833
          %1849 = vmatprep.subr.mxu0 0.0
          %1850 = vmatpush1.msra.mxu0 %v1832
          %1851 = vmatprep.subr.mxu0 0.0
          %1852 = vmatpush1.msra.mxu0 %v1831
          %1853 = vmatprep.subr.mxu0 0.0
          %1854 = vmatpush1.msra.mxu0 %v1830
          %1855 = vmatprep.subr.mxu0 0.0
          %1856 = vmatpush1.msra.mxu0 %v1829
          %1857 = vmatprep.subr.mxu0 0.0
          %1858 = vmatpush1.msra.mxu0 %v1828
          %1859 = vmatprep.subr.mxu0 0.0
          %1860 = vmatpush1.msra.mxu0 %v1827
          %1861 = vmatprep.subr.mxu0 0.0
          %1862 = vmatpush1.msra.mxu0 %v1826
          %1863 = vmatprep.subr.mxu0 0.0
          %1864 = vmatpush1.msra.mxu0 %v1825
          %1865 = vmatprep.subr.mxu0 0.0
          %1866 = vmatpush1.msra.mxu0 %v1824
          %1867 = vmatprep.subr.mxu0 0.0
          %1868 = vmatpush1.msra.mxu0 %v1823
          %1869 = vmatprep.subr.mxu0 0.0
          %1870 = vmatpush1.msra.mxu0 %v1822
          %1871 = vmatprep.subr.mxu0 0.0
          %1872 = vmatpush1.msra.mxu0 %v1821
          %1873 = vmatprep.subr.mxu0 0.0
          %1874 = vmatpush1.msra.mxu0 %v1820
          %1875 = vmatprep.subr.mxu0 0.0
          %1876 = vmatpush2.msra.mxu0 0.0
          %1877 = vmatprep.subr.mxu0 0.0
          %1878 = vmatpush2.msra.mxu0 0.0
          %1879 = vmatprep.subr.mxu0 0.0
          %1880 = vmatpush2.msra.mxu0 0.0
          %1881 = vmatprep.subr.mxu0 0.0
          %1882 = vmatpush2.msra.mxu0 0.0
          %1883 = vmatprep.subr.mxu0 0.0
          %1884 = vmatpush2.msra.mxu0 0.0
          %1885 = vmatprep.subr.mxu0 0.0
          %1886 = vmatpush2.msra.mxu0 0.0
          %1887 = vmatprep.subr.mxu0 0.0
          %1888 = vmatpush2.msra.mxu0 0.0
          %1889 = vmatprep.subr.mxu0 0.0
          %1890 = vmatpush2.msra.mxu0 0.0
          %1891 = vmatprep.subr.mxu0 0.0
          %1892 = vmatpush2.msra.mxu0 0.0
          %1893 = vmatprep.subr.mxu0 0.0
          %1894 = vmatpush2.msra.mxu0 0.0
          %1895 = vmatprep.subr.mxu0 0.0
          %1896 = vmatpush2.msra.mxu0 0.0
          %1897 = vmatprep.subr.mxu0 0.0
          %1898 = vmatpush2.msra.mxu0 0.0
          %1899 = vmatprep.subr.mxu0 0.0
          %1900 = vmatpush2.msra.mxu0 0.0
          %1901 = vmatprep.subr.mxu0 0.0
          %1902 = vmatpush2.msra.mxu0 0.0
          %1903 = vmatprep.subr.mxu0 0.0
          %1904 = vmatpush2.msra.mxu0 0.0
          %1905 = vmatprep.subr.mxu0 0.0
          %1906 = vmatpush2.msra.mxu0 0.0
          %1907 = vmatprep.mubr.f32.mxu0 0.0
          %1908 = vmatmul.mubr.f32.gmra.mxu0 %v1819
          %v1909 = vpop.f32.mrf.mxu0
          %v1910 = vadd.f32 %v1841, %v1909
          %v1911 = vpop.f32.mrf.mxu0
          %1912 = vdwg.mxu0
          %1913 = vst [vmem:[#allocation11] sm:$0x3] %v1910
        $region72: #{tpu_custom_call.1} parent=47 // pred_fallthru
          _
        // Predicated region
        $region73: #{tpu_custom_call.1} parent=47 // pred_check
          %p1914 = pneg %p208
        $region74: #{tpu_custom_call.1} parent=47 // pred_check_branch
          %1916 = sbr.rel (%p1914) target = $region76
        $region75: #{tpu_custom_call.1} parent=47 // pred_region
          %s1918 = ssub.s32 32, 32
          %1919 = vsyncadd [#allocation5], %s1918
          %s1920 = smul.addr %s28, 32
          %s1921 = scalar_lea.hbm %s7, %s1920
          %s1923 = sshll.u32 [#allocation11], 4
          %s1924 = int_to_ptr.vmem [resolvable:$true] %s1923
          %1926 = dma.vmem_to_hbm [thread:$0]  %s1924, 32, %s1921, [#allocation5]
        $region76: #{tpu_custom_call.1} parent=47 // pred_fallthru
          _
        // Predicated region
        $region77: #{tpu_custom_call.1} parent=47 // pred_check
          %p1927 = pneg %p208
        $region78: #{tpu_custom_call.1} parent=47 // pred_check_branch
          %1929 = sbr.rel (%p1927) target = $region80
        $region79: #{tpu_custom_call.1} parent=47 // pred_region
          %1930 = dma.done [#allocation5], 32
        $region80: #{tpu_custom_call.1} parent=47 // pred_fallthru
          _
      $region48: #{tpu_custom_call.1} parent=5 // pred_fallthru
        _
      %p1931 = scmp.le.s32.totalorder 2, %s19
      // Predicated region
      $region81: #{tpu_custom_call.1} parent=5 // pred_check
        %p1932 = pneg %p1931
      $region82: #{tpu_custom_call.1} parent=5 // pred_check_branch
        %1934 = sbr.rel (%p1932) target = $region84
      $region83: #{tpu_custom_call.1} parent=5 // pred_region
        %s1935 = ssub.s32 %s19, 2
      $region84: #{tpu_custom_call.1} parent=5 // pred_fallthru
        _
    $region6: #{tpu_custom_call.1} parent=1 // loop_footer
      %s23 = sadd.s32 1, %s19
    $region7: #{tpu_custom_call.1} parent=1 // loop_footer_branch
      %18 = sbr.rel target = $region3
    $region8: #{tpu_custom_call.1} parent=1 // loop_exit
      _
    %1936 = vsyncpa [#allocation4], 1
    %s1937 = scalar_lea.sflag [#allocation4], 1
    %1938 = vsyncpa %s1937, 1
    %1939 = vsyncpa [#allocation7], 1
    %1940 = vsyncpa [#allocation10], 1
    %1941 = vsyncpa [#allocation5], 1
    %s1942 = scalar_lea.sflag [#allocation5], 1
    %1943 = vsyncpa %s1942, 1

</llo_original>
